<compile_context>
chip_gen: v6e
topology: v6e:2x2x1
jax: 0.10.0
libtpu: 0.0.40
codegen_flags: <defaults>
</compile_context>

<pallas_src>
import functools
import math

import jax
import jax.numpy as jnp
from jax.experimental import pallas as pl
from jax.experimental.pallas import tpu as pltpu


def _exact_gelu(x):
    # torch.nn.functional.gelu default (erf-based, not tanh approximation), f32.
    return 0.5 * x * (1.0 + jax.lax.erf(x * (1.0 / math.sqrt(2.0))))


def _test_model_kernel(depth, x_ref, wqv_ref, wmem_ref, bv_ref, pred_ref, loss_ref):
    D = x_ref.shape[1]

    # bf16 operands for the MXU; all accumulation in f32.
    x = x_ref[...].astype(wqv_ref.dtype)                               # (T, D)

    # --- fused to_queries + Wv matmul: single (T,D)x(D,2D) MXU pass ---------
    qp = jnp.dot(x, wqv_ref[...], preferred_element_type=jnp.float32)  # (T, 2D) f32
    q = qp[:, :D]                                                      # queries
    pred = qp[:, D:] + bv_ref[...]                                     # x @ Wv^T + bv (f32)

    # --- MemoryBloc chain (exact erf-GELU between layers) -------------------
    mem = q
    for i in range(depth):                                             # static unroll
        mem = jnp.dot(mem.astype(wmem_ref.dtype), wmem_ref[i],
                      preferred_element_type=jnp.float32)
        if i < depth - 1:
            mem = _exact_gelu(mem)

    pred_ref[...] = pred.astype(pred_ref.dtype)

    # --- memorize: per-tile partial sum-of-squares (mean finalized outside) -
    diff = mem - pred
    ssq = jnp.sum(diff * diff)                                         # scalar f32
    loss_ref[...] = jnp.full(loss_ref.shape, ssq, dtype=loss_ref.dtype)


def prepare_params(wq, wmem, wv, bv, *, param_dtype=jnp.bfloat16):
    """One-time (hoisted) parameter plumbing — NOT on the per-forward path.

    wq, wv: (D, D) torch-layout (out, in); wmem: (depth, D, D); bv: (D,).
    Returns the fused (D, 2D) [Wq^T | Wv^T] operand, bf16 memory stack, f32 bias.
    """
    D = wq.shape[0]
    wqv_t = jnp.concatenate([wq.T, wv.T], axis=1).astype(param_dtype)   # (D, 2D)
    return wqv_t, wmem.astype(param_dtype), bv.reshape(1, D).astype(jnp.float32)


def _pick_row_tile(S):
    # Target 256 rows (full MXU height on v6e/v7x); fall back to whatever divides S,
    # else take the whole array (full-dim blocks are always legal).
    for t in (256, 128, 64, 32, 16, 8):
        if S % t == 0:
            return t
    return S


@functools.partial(jax.jit, static_argnames=("depth",))
def test_model_forward(x, wqv_t, wmem, bv2d, *, depth):
    """x: (S, D) f32; wqv_t: (D, 2D) bf16; wmem: (depth, D, D) bf16; bv2d: (1, D) f32."""
    S, D = x.shape
    tile_s = _pick_row_tile(S)
    n_tiles = max(S // tile_s, 1)

    # VMEM budget estimate (streamed x/pred double-buffered + resident weights
    # + live f32 intermediates) with headroom, clamped to the smallest physical VMEM.
    est = (2 * (tile_s * D * 4 + tile_s * D * 4 + 8 * 128 * 4)
           + (D * 2 * D * 2 + depth * D * D * 2 + D * 4)
           + 2 * (tile_s * 2 * D * 4 + tile_s * D * 4)
           + (4 << 20))
    vmem_limit = min(max(est, 16 << 20), 64 << 20)

    cost = pl.CostEstimate(
        flops=2 * S * D * (2 * D) + depth * 2 * S * D * D,
        transcendentals=S * D * max(depth - 1, 0),
        bytes_accessed=(2 * S * D * 4 + D * 2 * D * 2 + depth * D * D * 2
                        + D * 4 + n_tiles * 8 * 128 * 4),
    )

    kernel = functools.partial(_test_model_kernel, depth)
    pred, partial = pl.pallas_call(
        kernel,
        grid=(n_tiles,),
        in_specs=[
            pl.BlockSpec((tile_s, D), lambda i: (i, 0)),          # x: streamed row tiles
            pl.BlockSpec((D, 2 * D), lambda i: (0, 0)),           # Wq|Wv: resident
            pl.BlockSpec((depth, D, D), lambda i: (0, 0, 0)),     # memory stack: resident
            pl.BlockSpec((1, D), lambda i: (0, 0)),               # bias: resident
        ],
        out_specs=(
            pl.BlockSpec((tile_s, D), lambda i: (i, 0)),          # predicted row tiles
            pl.BlockSpec((1, 8, 128), lambda i: (i, 0, 0)),       # per-tile ssq partials
        ),
        out_shape=(
            jax.ShapeDtypeStruct((S, D), jnp.float32),
            jax.ShapeDtypeStruct((n_tiles, 8, 128), jnp.float32),
        ),
        compiler_params=pltpu.CompilerParams(
            dimension_semantics=("parallel",),
            vmem_limit_bytes=vmem_limit,
        ),
        cost_estimate=cost,
    )(x, wqv_t, wmem, bv2d)

    # Finalize the mean once (tiny (n_tiles,) reduce), matching torch MSE 'mean'.
    mem_loss = jnp.sum(partial[:, 0, 0]) * (1.0 / (S * D))
    return pred, mem_loss


def _init_params(key, width, depth):
    kq, km, kwv, kbv = jax.random.split(key, 4)

    # to_queries: nn.Linear(width, width, bias=False)
    bound_lin = 1.0 / math.sqrt(width)
    wq = jax.random.uniform(kq, (width, width), jnp.float32, -bound_lin, bound_lin)

    # MemoryBloc weights: xavier_uniform on (width, width)
    bound_xav = math.sqrt(6.0 / (width + width))
    wmem = jax.random.uniform(km, (depth, width, width), jnp.float32,
                              -bound_xav, bound_xav)

    # Wv: nn.Linear(width, width) with bias
    wv = jax.random.uniform(kwv, (width, width), jnp.float32, -bound_lin, bound_lin)
    bv = jax.random.uniform(kbv, (width,), jnp.float32, -bound_lin, bound_lin)
    return wq, wmem, wv, bv


if __name__ == "__main__":
    WIDTH = 128   # hidden dim (lane axis)
    DEPTH = 2
    SEQ = 512     # rows: tiled into 256-row grid steps (parallel axis)

    key = jax.random.PRNGKey(0)
    kx, kp = jax.random.split(key)
    x = jax.random.normal(kx, (SEQ, WIDTH), jnp.float32)
    wq, wmem, wv, bv = _init_params(kp, WIDTH, DEPTH)

    # Hoisted, one-time param prep (fused Wq|Wv operand, bf16 cast).
    wqv_t, wmem_p, bv2d = prepare_params(wq, wmem, wv, bv)

    pred, mem_loss = test_model_forward(x, wqv_t, wmem_p, bv2d, depth=DEPTH)
    jax.block_until_ready((pred, mem_loss))

    # Pure-JAX f32 reference of the same math (kernel uses bf16 weights, f32 accumulate).
    q_ref = x @ wq.T
    m_ref = q_ref
    for i in range(DEPTH):
        m_ref = m_ref @ wmem[i]
        if i < DEPTH - 1:
            m_ref = 0.5 * m_ref * (1.0 + jax.lax.erf(m_ref / math.sqrt(2.0)))
    p_ref = x @ wv.T + bv
    l_ref = jnp.mean((m_ref - p_ref) ** 2)

    assert jnp.allclose(pred, p_ref, atol=3e-2, rtol=3e-2), "pred mismatch"
    assert jnp.allclose(mem_loss, l_ref, atol=3e-2, rtol=5e-2), "loss mismatch"

    print("KERNEL_OK")
</pallas_src>

<mosaic_0001>
module attributes {stable_mosaic.version = 11 : i64} {
  func.func @_test_model_kernel(%arg0: i32, %arg1: memref<256x128xf32, #tpu.memory_space<vmem>>, %arg2: memref<128x256xbf16, #tpu.memory_space<vmem>>, %arg3: memref<2x128x128xbf16, #tpu.memory_space<vmem>>, %arg4: memref<1x128xf32, #tpu.memory_space<vmem>>, %arg5: memref<256x128xf32, #tpu.memory_space<vmem>>, %arg6: memref<1x8x128xf32, #tpu.memory_space<vmem>>) attributes {dimension_semantics = [#tpu.dimension_semantics<parallel>], iteration_bounds = array<i64: 2>, scalar_prefetch = 0 : i64, scratch_operands = 0 : i64, tpu.core_type = #tpu.core_type<tc>, window_params = [{transform_indices = @transform_0, window_bounds = array<i64: 256, 128>}, {pipeline_mode = #tpu.pipeline_mode<synchronous>, transform_indices = @transform_1, window_bounds = array<i64: 128, 256>}, {pipeline_mode = #tpu.pipeline_mode<synchronous>, transform_indices = @transform_2, window_bounds = array<i64: 2, 128, 128>}, {pipeline_mode = #tpu.pipeline_mode<synchronous>, transform_indices = @transform_3, window_bounds = array<i64: 1, 128>}, {transform_indices = @transform_4, window_bounds = array<i64: 256, 128>}, {transform_indices = @transform_5, window_bounds = array<i64: 1, 8, 128>}]} {
    %c0 = arith.constant 0 : index
    %c0_0 = arith.constant 0 : index
    %0 = vector.load %arg1[%c0, %c0_0] : memref<256x128xf32, #tpu.memory_space<vmem>>, vector<256x128xf32>
    %1 = arith.truncf %0 : vector<256x128xf32> to vector<256x128xbf16>
    %c0_1 = arith.constant 0 : index
    %c0_2 = arith.constant 0 : index
    %2 = vector.load %arg2[%c0_1, %c0_2] : memref<128x256xbf16, #tpu.memory_space<vmem>>, vector<128x256xbf16>
    %cst = arith.constant dense<0.000000e+00> : vector<256x256xf32>
    %3 = tpu.matmul %1, %2, %cst {dimension_numbers = #tpu.dot_dimension_numbers<[1], [0], [0], [1], [0, 0, 1, 1], [], []>} : vector<256x128xbf16>, vector<128x256xbf16>, vector<256x256xf32> -> vector<256x256xf32>
    %4 = vector.extract_strided_slice %3 {offsets = [0, 0], sizes = [256, 128], strides = [1, 1]} : vector<256x256xf32> to vector<256x128xf32>
    %5 = vector.extract_strided_slice %3 {offsets = [0, 128], sizes = [256, 128], strides = [1, 1]} : vector<256x256xf32> to vector<256x128xf32>
    %c0_3 = arith.constant 0 : index
    %c0_4 = arith.constant 0 : index
    %6 = vector.load %arg4[%c0_3, %c0_4] : memref<1x128xf32, #tpu.memory_space<vmem>>, vector<1x128xf32>
    %7 = vector.broadcast %6 : vector<1x128xf32> to vector<256x128xf32>
    %8 = arith.addf %5, %7 : vector<256x128xf32>
    %9 = arith.truncf %4 : vector<256x128xf32> to vector<256x128xbf16>
    %c0_5 = arith.constant 0 : index
    %c0_6 = arith.constant 0 : index
    %c0_7 = arith.constant 0 : index
    %10 = vector.load %arg3[%c0_5, %c0_6, %c0_7] : memref<2x128x128xbf16, #tpu.memory_space<vmem>>, vector<1x128x128xbf16>
    %11 = vector.shape_cast %10 : vector<1x128x128xbf16> to vector<128x128xbf16>
    %cst_8 = arith.constant dense<0.000000e+00> : vector<256x128xf32>
    %12 = tpu.matmul %9, %11, %cst_8 {dimension_numbers = #tpu.dot_dimension_numbers<[1], [0], [0], [1], [0, 0, 1, 1], [], []>} : vector<256x128xbf16>, vector<128x128xbf16>, vector<256x128xf32> -> vector<256x128xf32>
    %cst_9 = arith.constant 5.000000e-01 : f32
    %13 = vector.broadcast %cst_9 : f32 to vector<256x128xf32>
    %14 = arith.mulf %13, %12 : vector<256x128xf32>
    %cst_10 = arith.constant 0.707106769 : f32
    %15 = vector.broadcast %cst_10 : f32 to vector<256x128xf32>
    %16 = arith.mulf %12, %15 : vector<256x128xf32>
    %17 = math.erf %16 : vector<256x128xf32>
    %cst_11 = arith.constant 1.000000e+00 : f32
    %18 = vector.broadcast %cst_11 : f32 to vector<256x128xf32>
    %19 = arith.addf %18, %17 : vector<256x128xf32>
    %20 = arith.mulf %14, %19 : vector<256x128xf32>
    %21 = arith.truncf %20 : vector<256x128xf32> to vector<256x128xbf16>
    %c1 = arith.constant 1 : index
    %c0_12 = arith.constant 0 : index
    %c0_13 = arith.constant 0 : index
    %22 = vector.load %arg3[%c1, %c0_12, %c0_13] : memref<2x128x128xbf16, #tpu.memory_space<vmem>>, vector<1x128x128xbf16>
    %23 = vector.shape_cast %22 : vector<1x128x128xbf16> to vector<128x128xbf16>
    %cst_14 = arith.constant dense<0.000000e+00> : vector<256x128xf32>
    %24 = tpu.matmul %21, %23, %cst_14 {dimension_numbers = #tpu.dot_dimension_numbers<[1], [0], [0], [1], [0, 0, 1, 1], [], []>} : vector<256x128xbf16>, vector<128x128xbf16>, vector<256x128xf32> -> vector<256x128xf32>
    %c0_15 = arith.constant 0 : index
    %c0_16 = arith.constant 0 : index
    %25 = vector.load %arg5[%c0_15, %c0_16] : memref<256x128xf32, #tpu.memory_space<vmem>>, vector<256x128xf32>
    tpu.vector_store %arg5[%c0_15, %c0_16], %8 {strides = array<i32>} : memref<256x128xf32, #tpu.memory_space<vmem>>, vector<256x128xf32>,
    %26 = arith.subf %24, %8 : vector<256x128xf32>
    %27 = arith.mulf %26, %26 : vector<256x128xf32>
    %28 = vector.shape_cast %27 : vector<256x128xf32> to vector<1x256x128xf32>
    %cst_17 = arith.constant dense<0.000000e+00> : vector<1xf32>
    %29 = vector.multi_reduction <add>, %28, %cst_17 [1, 2] : vector<1x256x128xf32> to vector<1xf32>
    %30 = vector.shape_cast %29 : vector<1xf32> to vector<1x1x1xf32>
    %31 = vector.extract %30[0, 0, 0] : f32 from vector<1x1x1xf32>
    %32 = vector.broadcast %31 : f32 to vector<1x8x128xf32>
    %c0_18 = arith.constant 0 : index
    %c0_19 = arith.constant 0 : index
    %c0_20 = arith.constant 0 : index
    %33 = vector.load %arg6[%c0_18, %c0_19, %c0_20] : memref<1x8x128xf32, #tpu.memory_space<vmem>>, vector<1x8x128xf32>
    tpu.vector_store %arg6[%c0_18, %c0_19, %c0_20], %32 {strides = array<i32>} : memref<1x8x128xf32, #tpu.memory_space<vmem>>, vector<1x8x128xf32>,
    return
  }
  func.func @transform_0(%arg0: i32) -> (i32, i32) {
    %c0_i32 = arith.constant 0 : i32
    %c0_i32_0 = arith.constant 0 : i32
    return %arg0, %c0_i32 : i32, i32
  }
  func.func @transform_1(%arg0: i32) -> (i32, i32) {
    %c0_i32 = arith.constant 0 : i32
    %c0_i32_0 = arith.constant 0 : i32
    %c0_i32_1 = arith.constant 0 : i32
    return %c0_i32, %c0_i32_0 : i32, i32
  }
  func.func @transform_2(%arg0: i32) -> (i32, i32, i32) {
    %c0_i32 = arith.constant 0 : i32
    %c0_i32_0 = arith.constant 0 : i32
    %c0_i32_1 = arith.constant 0 : i32
    %c0_i32_2 = arith.constant 0 : i32
    return %c0_i32, %c0_i32_0, %c0_i32_1 : i32, i32, i32
  }
  func.func @transform_3(%arg0: i32) -> (i32, i32) {
    %c0_i32 = arith.constant 0 : i32
    %c0_i32_0 = arith.constant 0 : i32
    %c0_i32_1 = arith.constant 0 : i32
    return %c0_i32, %c0_i32_0 : i32, i32
  }
  func.func @transform_4(%arg0: i32) -> (i32, i32) {
    %c0_i32 = arith.constant 0 : i32
    %c0_i32_0 = arith.constant 0 : i32
    return %arg0, %c0_i32 : i32, i32
  }
  func.func @transform_5(%arg0: i32) -> (i32, i32, i32) {
    %c0_i32 = arith.constant 0 : i32
    %c0_i32_0 = arith.constant 0 : i32
    %c0_i32_1 = arith.constant 0 : i32
    return %arg0, %c0_i32, %c0_i32_0 : i32, i32, i32
  }
}

</mosaic_0001>

<llo_original>
// kernel: test_model_forward.1
$region0: #{test_model_forward.1}
  #allocation0 [shape = 'u32[]', space=smem, size = 0x4, offset = 0x4, fixed_abs, tag = 'smem constant byte address 0x4 - core index']
  #allocation1 [shape = 'u32[144,128]{1,0:T(1,128)}', space=vmem, size = 0x12000, scoped, tag = 'internal scratch']
  %s0 = inlined_call_operand.hbm [shape: f32[512,128], index: 0, kind: input, shape index: {}]
  %s1 = inlined_call_operand.hbm [shape: bf16[128,256], index: 1, kind: input, shape index: {}]
  %s2 = inlined_call_operand.hbm [shape: bf16[2,128,128], index: 2, kind: input, shape index: {}]
  %s3 = inlined_call_operand.hbm [shape: f32[1,128], index: 3, kind: input, shape index: {}]
  %s4 = inlined_call_operand.hbm [shape: f32[512,128], index: 4, kind: output, shape index: {0}]
  %s5 = inlined_call_operand.vmem [shape: f32[2,8,128], index: 5, kind: output, shape index: {1}]
  %6 = xla_tuple %s4, %s5
  %s7 = sld [smem:[#allocation0]]
  $region73: #{test_model_forward.1} parent=0
    _
  %s9 = ssub.s32 1, %s7
  %s10 = scalar_select 0, %s9, %s7
  $region1: #{test_model_forward.1} parent=0
    #allocation2 [shape = 'u8[262144]{0}', space=vmem, size = 0x40000, scoped, tag = 'input window, operand 0']
    #allocation3 [shape = 's32[2]{0}', space=sflag, size = 0x8, scoped, tag = 'scoped memory for test_model_forward.1']
    #allocation4 [shape = 's32[2]{0}', space=sflag, size = 0x8, scoped, tag = 'scoped memory for test_model_forward.1']
    #allocation5 [shape = 'u8[65536]{0}', space=vmem, size = 0x10000, scoped, tag = 'input window, operand 1, single buffered']
    #allocation6 [shape = 's32[1]{0}', space=sflag, size = 0x4, scoped, tag = 'scoped memory for test_model_forward.1']
    #allocation7 [shape = 'u8[65536]{0}', space=vmem, size = 0x10000, scoped, tag = 'input window, operand 2, single buffered']
    #allocation8 [shape = 'u8[512]{0}', space=vmem, size = 0x400, scoped, tag = 'input window, operand 3, single buffered']
    #allocation9 [shape = 's32[1]{0}', space=sflag, size = 0x4, scoped, tag = 'scoped memory for test_model_forward.1']
    #allocation10 [shape = 'u8[262144]{0}', space=vmem, size = 0x40000, scoped, tag = 'output window, operand 0']
    %11 = vsyncpa [#allocation3], 0
    %s12 = scalar_lea.sflag [#allocation3], 1
    %13 = vsyncpa %s12, 0
    %14 = vsyncpa [#allocation6], 0
    %15 = vsyncpa [#allocation9], 0
    %16 = vsyncpa [#allocation4], 0
    %s17 = scalar_lea.sflag [#allocation4], 1
    %18 = vsyncpa %s17, 0
    loop: start=0, step=1, limit=4
    $region2: #{test_model_forward.1} parent=1 // loop_pre_header
      _
    $region3: #{test_model_forward.1} parent=1 // loop_header
      %s20 = sphi 0, %s24
      %p21 = scmp.ge.s32.totalorder %s20, 4
      %s30 = sphi 0, %s32
      %s33 = sphi 0, %s30
      %s34 = sphi 0, %s33
      %s50 = sphi 0, %s34
      %s54 = sphi 0, %s54
      %s56 = sphi 0, %s54
      %s57 = sphi 0, %s56
      %s71 = sphi 0, %s57
      %s75 = sphi 0, %s75
      %s77 = sphi 0, %s75
      %s78 = sphi 0, %s77
      %s92 = sphi 0, %s78
      %s96 = sphi 0, %s96
      %s98 = sphi 0, %s96
      %s99 = sphi 0, %s98
      %s113 = sphi 0, %s99
      %s119 = sphi 0, %s121
      %s122 = sphi 0, %s119
      %s123 = sphi 0, %s122
      %s139 = sphi 0, %s123
      %s145 = sphi 0, %s147
      %s148 = sphi 0, %s145
      %s149 = sphi 0, %s148
      %s165 = sphi 0, %s149
    $region4: #{test_model_forward.1} parent=1 // loop_header_branch
      %23 = sbr.rel (%p21) target = $region8
    $region5: #{test_model_forward.1} parent=1 // loop_body
      %s25 = ssub.s32 %s20, 1
      %s26 = ssub.s32 %s20, 2
      %s27 = sadd.s32 %s20, 1
      %s28 = ssub.s32 %s20, %s27
      %p29 = scmp.eq.s32.totalorder %s28, 0
      %s31 = sadd.s32 %s30, 1
      %s32 = scalar_select %p29, %s30, %s31
      %p35 = pneg %p29
      %p36 = scmp.eq.s32.totalorder %s20, 1
      %p37 = por %p35, %p36
      %p38 = scmp.ne.s32.totalorder %s30, %s33
      %p39 = scmp.eq.s32.totalorder %s20, 0
      %p40 = por %p38, %p39
      %p41 = scmp.ne.s32.totalorder %s30, %s33
      %p42 = scmp.eq.s32.totalorder %s25, 1
      %p43 = por %p41, %p42
      %p44 = scmp.ne.s32.totalorder %s33, %s34
      %p45 = scmp.eq.s32.totalorder %s25, 0
      %p46 = por %p44, %p45
      %p47 = scmp.ne.s32.totalorder %s33, %s34
      %p48 = scmp.eq.s32.totalorder %s26, 1
      %p49 = por %p47, %p48
      %p51 = scmp.ne.s32.totalorder %s34, %s50
      %p52 = scmp.eq.s32.totalorder %s26, 0
      %p53 = por %p51, %p52
      %s55 = sadd.s32 %s54, 1
      %p58 = scmp.eq.s32.totalorder %s20, 1
      %p59 = scmp.ne.s32.totalorder %s54, %s56
      %p60 = scmp.eq.s32.totalorder %s20, 0
      %p61 = por %p59, %p60
      %p62 = scmp.ne.s32.totalorder %s54, %s56
      %p63 = scmp.eq.s32.totalorder %s25, 1
      %p64 = por %p62, %p63
      %p65 = scmp.ne.s32.totalorder %s56, %s57
      %p66 = scmp.eq.s32.totalorder %s25, 0
      %p67 = por %p65, %p66
      %p68 = scmp.ne.s32.totalorder %s56, %s57
      %p69 = scmp.eq.s32.totalorder %s26, 1
      %p70 = por %p68, %p69
      %p72 = scmp.ne.s32.totalorder %s57, %s71
      %p73 = scmp.eq.s32.totalorder %s26, 0
      %p74 = por %p72, %p73
      %s76 = sadd.s32 %s75, 1
      %p79 = scmp.eq.s32.totalorder %s20, 1
      %p80 = scmp.ne.s32.totalorder %s75, %s77
      %p81 = scmp.eq.s32.totalorder %s20, 0
      %p82 = por %p80, %p81
      %p83 = scmp.ne.s32.totalorder %s75, %s77
      %p84 = scmp.eq.s32.totalorder %s25, 1
      %p85 = por %p83, %p84
      %p86 = scmp.ne.s32.totalorder %s77, %s78
      %p87 = scmp.eq.s32.totalorder %s25, 0
      %p88 = por %p86, %p87
      %p89 = scmp.ne.s32.totalorder %s77, %s78
      %p90 = scmp.eq.s32.totalorder %s26, 1
      %p91 = por %p89, %p90
      %p93 = scmp.ne.s32.totalorder %s78, %s92
      %p94 = scmp.eq.s32.totalorder %s26, 0
      %p95 = por %p93, %p94
      %s97 = sadd.s32 %s96, 1
      %p100 = scmp.eq.s32.totalorder %s20, 1
      %p101 = scmp.ne.s32.totalorder %s96, %s98
      %p102 = scmp.eq.s32.totalorder %s20, 0
      %p103 = por %p101, %p102
      %p104 = scmp.ne.s32.totalorder %s96, %s98
      %p105 = scmp.eq.s32.totalorder %s25, 1
      %p106 = por %p104, %p105
      %p107 = scmp.ne.s32.totalorder %s98, %s99
      %p108 = scmp.eq.s32.totalorder %s25, 0
      %p109 = por %p107, %p108
      %p110 = scmp.ne.s32.totalorder %s98, %s99
      %p111 = scmp.eq.s32.totalorder %s26, 1
      %p112 = por %p110, %p111
      %p114 = scmp.ne.s32.totalorder %s99, %s113
      %p115 = scmp.eq.s32.totalorder %s26, 0
      %p116 = por %p114, %p115
      %s117 = ssub.s32 %s20, %s27
      %p118 = scmp.eq.s32.totalorder %s117, 0
      %s120 = sadd.s32 %s119, 1
      %s121 = scalar_select %p118, %s119, %s120
      %p124 = pneg %p118
      %p125 = scmp.eq.s32.totalorder %s20, 1
      %p126 = por %p124, %p125
      %p127 = scmp.ne.s32.totalorder %s119, %s122
      %p128 = scmp.eq.s32.totalorder %s20, 0
      %p129 = por %p127, %p128
      %p130 = scmp.ne.s32.totalorder %s119, %s122
      %p131 = scmp.eq.s32.totalorder %s25, 1
      %p132 = por %p130, %p131
      %p133 = scmp.ne.s32.totalorder %s122, %s123
      %p134 = scmp.eq.s32.totalorder %s25, 0
      %p135 = por %p133, %p134
      %p136 = scmp.ne.s32.totalorder %s122, %s123
      %p137 = scmp.eq.s32.totalorder %s26, 1
      %p138 = por %p136, %p137
      %p140 = scmp.ne.s32.totalorder %s123, %s139
      %p141 = scmp.eq.s32.totalorder %s26, 0
      %p142 = por %p140, %p141
      %s143 = ssub.s32 %s20, %s27
      %p144 = scmp.eq.s32.totalorder %s143, 0
      %s146 = sadd.s32 %s145, 1
      %s147 = scalar_select %p144, %s145, %s146
      %p150 = pneg %p144
      %p151 = scmp.eq.s32.totalorder %s20, 1
      %p152 = por %p150, %p151
      %p153 = scmp.ne.s32.totalorder %s145, %s148
      %p154 = scmp.eq.s32.totalorder %s20, 0
      %p155 = por %p153, %p154
      %p156 = scmp.ne.s32.totalorder %s145, %s148
      %p157 = scmp.eq.s32.totalorder %s25, 1
      %p158 = por %p156, %p157
      %p159 = scmp.ne.s32.totalorder %s148, %s149
      %p160 = scmp.eq.s32.totalorder %s25, 0
      %p161 = por %p159, %p160
      %p162 = scmp.ne.s32.totalorder %s148, %s149
      %p163 = scmp.eq.s32.totalorder %s26, 1
      %p164 = por %p162, %p163
      %p166 = scmp.ne.s32.totalorder %s149, %s165
      %p167 = scmp.eq.s32.totalorder %s26, 0
      %p168 = por %p166, %p167
      %p169 = scmp.le.s32.totalorder 1, %s20
      %p170 = scmp.lt.s32.totalorder %s20, 3
      %p171 = pnand %p169, %p170
      %p172 = pneg %p171
      // Predicated region
      $region9: #{test_model_forward.1} parent=5 // pred_check
        _
      $region10: #{test_model_forward.1} parent=5 // pred_check_branch
        %174 = sbr.rel (%p171) target = $region12
      $region11: #{test_model_forward.1} parent=5 // pred_region
        %s175 = ssub.s32 %s20, 1
        // Predicated region
        $region13: #{test_model_forward.1} parent=11 // pred_check
          %p176 = pneg %p67
        $region14: #{test_model_forward.1} parent=11 // pred_check_branch
          %178 = sbr.rel (%p176) target = $region16
        $region15: #{test_model_forward.1} parent=11 // pred_region
          %s180 = ssub.s32 2048, 2048
          %181 = vsyncadd [#allocation6], %s180
          %s182 = sshll.u32 [#allocation5], 4
          %s183 = int_to_ptr.vmem [resolvable:$true] %s182
          %188 = dma.hbm_to_vmem [thread:$0]  %s1, 2048, %s183, [#allocation6], 128, 128, 8
        $region16: #{test_model_forward.1} parent=11 // pred_fallthru
          _
        // Predicated region
        $region17: #{test_model_forward.1} parent=11 // pred_check
          %p189 = pneg %p88
        $region18: #{test_model_forward.1} parent=11 // pred_check_branch
          %191 = sbr.rel (%p189) target = $region20
        $region19: #{test_model_forward.1} parent=11 // pred_region
          %s193 = ssub.s32 2048, 2048
          %194 = vsyncadd [#allocation6], %s193
          %s195 = sshll.u32 [#allocation7], 4
          %s196 = int_to_ptr.vmem [resolvable:$true] %s195
          %201 = dma.hbm_to_vmem [thread:$0]  %s2, 2048, %s196, [#allocation6], 64, 64, 4
        $region20: #{test_model_forward.1} parent=11 // pred_fallthru
          _
        // Predicated region
        $region21: #{test_model_forward.1} parent=11 // pred_check
          %p202 = pneg %p109
        $region22: #{test_model_forward.1} parent=11 // pred_check_branch
          %204 = sbr.rel (%p202) target = $region24
        $region23: #{test_model_forward.1} parent=11 // pred_region
          %s206 = ssub.s32 16, 16
          %207 = vsyncadd [#allocation9], %s206
          %s209 = sshll.u32 [#allocation8], 4
          %s210 = int_to_ptr.vmem [resolvable:$true] %s209
          %212 = dma.hbm_to_vmem [thread:$0]  %s3, 16, %s210, [#allocation9]
        $region24: #{test_model_forward.1} parent=11 // pred_fallthru
          _
      $region12: #{test_model_forward.1} parent=5 // pred_fallthru
        _
      %p213 = scmp.lt.s32.totalorder %s20, 2
      // Predicated region
      $region25: #{test_model_forward.1} parent=5 // pred_check
        %p214 = pneg %p213
      $region26: #{test_model_forward.1} parent=5 // pred_check_branch
        %216 = sbr.rel (%p214) target = $region28
      $region27: #{test_model_forward.1} parent=5 // pred_region
        // Predicated region
        $region29: #{test_model_forward.1} parent=27 // pred_check
          %p217 = pneg %p40
        $region30: #{test_model_forward.1} parent=27 // pred_check_branch
          %219 = sbr.rel (%p217) target = $region32
        $region31: #{test_model_forward.1} parent=27 // pred_region
          %s220 = sand.u32 %s30, 1
          %s221 = scalar_lea.sflag [#allocation3], %s220
          %s222 = sand.u32 %s30, 1
          %s223 = smul.addr %s222, 256
          %s224 = scalar_lea.vmem [#allocation2], %s223
          %s225 = smul.u32 32, %s20
          %s227 = ssub.s32 4096, 4096
          %228 = vsyncadd %s221, %s227
          %s229 = smul.addr %s225, 128
          %s230 = scalar_lea.hbm %s0, %s229
          %s231 = sshll.u32 %s224, 4
          %s232 = int_to_ptr.vmem [resolvable:$true] %s231
          %237 = dma.hbm_to_vmem [thread:$0]  %s230, 4096, %s232, %s221, 128, 128, 8
        $region32: #{test_model_forward.1} parent=27 // pred_fallthru
          _
      $region28: #{test_model_forward.1} parent=5 // pred_fallthru
        _
      %p238 = scmp.le.s32.totalorder 1, %s20
      %p239 = scmp.lt.s32.totalorder %s20, 3
      %p240 = pnand %p238, %p239
      %p241 = pneg %p240
      // Predicated region
      $region33: #{test_model_forward.1} parent=5 // pred_check
        _
      $region34: #{test_model_forward.1} parent=5 // pred_check_branch
        %243 = sbr.rel (%p240) target = $region36
      $region35: #{test_model_forward.1} parent=5 // pred_region
        %s244 = ssub.s32 %s20, 1
        %s245 = sand.u32 %s33, 1
        %s246 = scalar_lea.sflag [#allocation3], %s245
        %s247 = sand.u32 %s33, 1
        %s248 = smul.addr %s247, 256
        %s249 = scalar_lea.vmem [#allocation2], %s248
        // Predicated region
        $region37: #{test_model_forward.1} parent=35 // pred_check
          %p250 = pneg %p46
        $region38: #{test_model_forward.1} parent=35 // pred_check_branch
          %252 = sbr.rel (%p250) target = $region40
        $region39: #{test_model_forward.1} parent=35 // pred_region
          %253 = dma.done %s246, 4096
        $region40: #{test_model_forward.1} parent=35 // pred_fallthru
          _
        // Predicated region
        $region41: #{test_model_forward.1} parent=35 // pred_check
          %p254 = pneg %p67
        $region42: #{test_model_forward.1} parent=35 // pred_check_branch
          %256 = sbr.rel (%p254) target = $region44
        $region43: #{test_model_forward.1} parent=35 // pred_region
          %257 = dma.done [#allocation6], 2048
        $region44: #{test_model_forward.1} parent=35 // pred_fallthru
          _
        // Predicated region
        $region45: #{test_model_forward.1} parent=35 // pred_check
          %p258 = pneg %p88
        $region46: #{test_model_forward.1} parent=35 // pred_check_branch
          %260 = sbr.rel (%p258) target = $region48
        $region47: #{test_model_forward.1} parent=35 // pred_region
          %261 = dma.done [#allocation6], 2048
        $region48: #{test_model_forward.1} parent=35 // pred_fallthru
          _
        // Predicated region
        $region49: #{test_model_forward.1} parent=35 // pred_check
          %p262 = pneg %p109
        $region50: #{test_model_forward.1} parent=35 // pred_check_branch
          %264 = sbr.rel (%p262) target = $region52
        $region51: #{test_model_forward.1} parent=35 // pred_region
          %265 = dma.done [#allocation9], 16
        $region52: #{test_model_forward.1} parent=35 // pred_fallthru
          _
        %s266 = sand.u32 %s33, 1
        %s267 = scalar_lea.sflag [#allocation3], %s266
        %s268 = sand.u32 %s33, 1
        %s269 = smul.addr %s268, 256
        %s270 = scalar_lea.vmem [#allocation2], %s269
        %p271 = pneg %p46
        %p272 = pneg %p43
        %p273 = pneg %p67
        %p274 = pneg %p64
        %p275 = pneg %p88
        %p276 = pneg %p85
        %p277 = pneg %p109
        %p278 = pneg %p106
        %p279 = pneg %p135
        %p280 = pneg %p132
        %s281 = sand.u32 %s122, 1
        %s282 = scalar_lea.sflag [#allocation4], %s281
        %s283 = sand.u32 %s122, 1
        %s284 = smul.addr %s283, 256
        %s285 = scalar_lea.vmem [#allocation10], %s284
        %p286 = pneg %p161
        %p287 = pneg %p158
        %p288 = scmp.lt.s32.totalorder %s25, 1
        %s289 = scalar_select %p288, %s25, 1
        %s290 = smul.addr %s289, 8
        %s291 = scalar_lea.vmem %s5, %s290
        %s292 = smul.u32 32, %s25
        %s293 = smul.u32 32, %s25
        %p294 = scmp.lt.s32.totalorder %s25, 1
        %s295 = scalar_select %p294, %s25, 1
        %s296 = smul.addr %s295, 8
        %s297 = scalar_lea.vmem %s5, %s296
        %v299 = vld [vmem:[%s249] sm:$0xff]
        %v300 = vld [vmem:[%s249 + $0x8] sm:$0xff]
        %v301 = vld [vmem:[%s249 + $0x10] sm:$0xff]
        %v302 = vld [vmem:[%s249 + $0x18] sm:$0xff]
        %v303 = vld [vmem:[%s249 + $0x20] sm:$0xff]
        %v304 = vld [vmem:[%s249 + $0x28] sm:$0xff]
        %v305 = vld [vmem:[%s249 + $0x30] sm:$0xff]
        %v306 = vld [vmem:[%s249 + $0x38] sm:$0xff]
        %v307 = vld [vmem:[%s249 + $0x40] sm:$0xff]
        %v308 = vld [vmem:[%s249 + $0x48] sm:$0xff]
        %v309 = vld [vmem:[%s249 + $0x50] sm:$0xff]
        %v310 = vld [vmem:[%s249 + $0x58] sm:$0xff]
        %v311 = vld [vmem:[%s249 + $0x60] sm:$0xff]
        %v312 = vld [vmem:[%s249 + $0x68] sm:$0xff]
        %v313 = vld [vmem:[%s249 + $0x70] sm:$0xff]
        %v314 = vld [vmem:[%s249 + $0x78] sm:$0xff]
        %v315 = vld [vmem:[%s249 + $0x80] sm:$0xff]
        %v316 = vld [vmem:[%s249 + $0x88] sm:$0xff]
        %v317 = vld [vmem:[%s249 + $0x90] sm:$0xff]
        %v318 = vld [vmem:[%s249 + $0x98] sm:$0xff]
        %v319 = vld [vmem:[%s249 + $0xa0] sm:$0xff]
        %v320 = vld [vmem:[%s249 + $0xa8] sm:$0xff]
        %v321 = vld [vmem:[%s249 + $0xb0] sm:$0xff]
        %v322 = vld [vmem:[%s249 + $0xb8] sm:$0xff]
        %v323 = vld [vmem:[%s249 + $0xc0] sm:$0xff]
        %v324 = vld [vmem:[%s249 + $0xc8] sm:$0xff]
        %v325 = vld [vmem:[%s249 + $0xd0] sm:$0xff]
        %v326 = vld [vmem:[%s249 + $0xd8] sm:$0xff]
        %v327 = vld [vmem:[%s249 + $0xe0] sm:$0xff]
        %v328 = vld [vmem:[%s249 + $0xe8] sm:$0xff]
        %v329 = vld [vmem:[%s249 + $0xf0] sm:$0xff]
        %v330 = vld [vmem:[%s249 + $0xf8] sm:$0xff]
        %v331 = vpack.c.bf16 %v300, %v299
        %v332 = vpack.c.bf16 %v302, %v301
        %v333 = vpack.c.bf16 %v304, %v303
        %v334 = vpack.c.bf16 %v306, %v305
        %v335 = vpack.c.bf16 %v308, %v307
        %v336 = vpack.c.bf16 %v310, %v309
        %v337 = vpack.c.bf16 %v312, %v311
        %v338 = vpack.c.bf16 %v314, %v313
        %v339 = vpack.c.bf16 %v316, %v315
        %v340 = vpack.c.bf16 %v318, %v317
        %v341 = vpack.c.bf16 %v320, %v319
        %v342 = vpack.c.bf16 %v322, %v321
        %v343 = vpack.c.bf16 %v324, %v323
        %v344 = vpack.c.bf16 %v326, %v325
        %v345 = vpack.c.bf16 %v328, %v327
        %v346 = vpack.c.bf16 %v330, %v329
        %v347 = vld [vmem:[#allocation5] sm:$0xff]
        %v348 = vld [vmem:[#allocation5 + $0x8] sm:$0xff]
        %v349 = vld [vmem:[#allocation5 + $0x10] sm:$0xff]
        %v350 = vld [vmem:[#allocation5 + $0x18] sm:$0xff]
        %v351 = vld [vmem:[#allocation5 + $0x20] sm:$0xff]
        %v352 = vld [vmem:[#allocation5 + $0x28] sm:$0xff]
        %v353 = vld [vmem:[#allocation5 + $0x30] sm:$0xff]
        %v354 = vld [vmem:[#allocation5 + $0x38] sm:$0xff]
        %v355 = vld [vmem:[#allocation5 + $0x40] sm:$0xff]
        %v356 = vld [vmem:[#allocation5 + $0x48] sm:$0xff]
        %v357 = vld [vmem:[#allocation5 + $0x50] sm:$0xff]
        %v358 = vld [vmem:[#allocation5 + $0x58] sm:$0xff]
        %v359 = vld [vmem:[#allocation5 + $0x60] sm:$0xff]
        %v360 = vld [vmem:[#allocation5 + $0x68] sm:$0xff]
        %v361 = vld [vmem:[#allocation5 + $0x70] sm:$0xff]
        %v362 = vld [vmem:[#allocation5 + $0x78] sm:$0xff]
        %v379 = vunpack.c.l.b16 %v347
        %v380 = vunpack.c.h.b16 %v347
        %v381 = vunpack.c.l.b16 %v348
        %v382 = vunpack.c.h.b16 %v348
        %v383 = vunpack.c.l.b16 %v349
        %v384 = vunpack.c.h.b16 %v349
        %v385 = vunpack.c.l.b16 %v350
        %v386 = vunpack.c.h.b16 %v350
        %v387 = vunpack.c.l.b16 %v351
        %v388 = vunpack.c.h.b16 %v351
        %v389 = vunpack.c.l.b16 %v352
        %v390 = vunpack.c.h.b16 %v352
        %v391 = vunpack.c.l.b16 %v353
        %v392 = vunpack.c.h.b16 %v353
        %v393 = vunpack.c.l.b16 %v354
        %v394 = vunpack.c.h.b16 %v354
        %v395 = vunpack.c.l.b16 %v355
        %v396 = vunpack.c.h.b16 %v355
        %v397 = vunpack.c.l.b16 %v356
        %v398 = vunpack.c.h.b16 %v356
        %v399 = vunpack.c.l.b16 %v357
        %v400 = vunpack.c.h.b16 %v357
        %v401 = vunpack.c.l.b16 %v358
        %v402 = vunpack.c.h.b16 %v358
        %v403 = vunpack.c.l.b16 %v359
        %v404 = vunpack.c.h.b16 %v359
        %v405 = vunpack.c.l.b16 %v360
        %v406 = vunpack.c.h.b16 %v360
        %v407 = vunpack.c.l.b16 %v361
        %v408 = vunpack.c.h.b16 %v361
        %v409 = vunpack.c.l.b16 %v362
        %v410 = vunpack.c.h.b16 %v362
        %v411 = vpack.c.b16 %v381, %v379
        %v412 = vpack.c.b16 %v382, %v380
        %v413 = vpack.c.b16 %v385, %v383
        %v414 = vpack.c.b16 %v386, %v384
        %v415 = vpack.c.b16 %v389, %v387
        %v416 = vpack.c.b16 %v390, %v388
        %v417 = vpack.c.b16 %v393, %v391
        %v418 = vpack.c.b16 %v394, %v392
        %v419 = vpack.c.b16 %v397, %v395
        %v420 = vpack.c.b16 %v398, %v396
        %v421 = vpack.c.b16 %v401, %v399
        %v422 = vpack.c.b16 %v402, %v400
        %v423 = vpack.c.b16 %v405, %v403
        %v424 = vpack.c.b16 %v406, %v404
        %v425 = vpack.c.b16 %v409, %v407
        %v426 = vpack.c.b16 %v410, %v408
        %443 = vmatprep.subr.bf16.mxu0 %v426
        %444 = vmatpush1.bf16.msra.mxu0 %v425
        %445 = vmatprep.subr.bf16.mxu0 %v424
        %446 = vmatpush1.bf16.msra.mxu0 %v423
        %447 = vmatprep.subr.bf16.mxu0 %v422
        %448 = vmatpush1.bf16.msra.mxu0 %v421
        %449 = vmatprep.subr.bf16.mxu0 %v420
        %450 = vmatpush1.bf16.msra.mxu0 %v419
        %451 = vmatprep.subr.bf16.mxu0 %v418
        %452 = vmatpush1.bf16.msra.mxu0 %v417
        %453 = vmatprep.subr.bf16.mxu0 %v416
        %454 = vmatpush1.bf16.msra.mxu0 %v415
        %455 = vmatprep.subr.bf16.mxu0 %v414
        %456 = vmatpush1.bf16.msra.mxu0 %v413
        %457 = vmatprep.subr.bf16.mxu0 %v412
        %458 = vmatpush1.bf16.msra.mxu0 %v411
        %459 = vmatprep.subr.bf16.mxu0 0
        %460 = vmatpush2.bf16.msra.mxu0 0
        %461 = vmatprep.subr.bf16.mxu0 0
        %462 = vmatpush2.bf16.msra.mxu0 0
        %463 = vmatprep.subr.bf16.mxu0 0
        %464 = vmatpush2.bf16.msra.mxu0 0
        %465 = vmatprep.subr.bf16.mxu0 0
        %466 = vmatpush2.bf16.msra.mxu0 0
        %467 = vmatprep.subr.bf16.mxu0 0
        %468 = vmatpush2.bf16.msra.mxu0 0
        %469 = vmatprep.subr.bf16.mxu0 0
        %470 = vmatpush2.bf16.msra.mxu0 0
        %471 = vmatprep.subr.bf16.mxu0 0
        %472 = vmatpush2.bf16.msra.mxu0 0
        %473 = vmatprep.subr.bf16.mxu0 0
        %474 = vmatpush2.bf16.msra.mxu0 0
        %475 = vmatprep.mubr.bf16.mxu0 0
        %476 = vmatmul.mubr.bf16.gmra.mxu0 %v331
        %v477 = vpop.f32.mrf.mxu0
        %v478 = vadd.f32 0.0, %v477
        %v479 = vpop.f32.mrf.mxu0
        %v480 = vadd.f32 0.0, %v479
        %v481 = vpop.f32.mrf.mxu0
        %v482 = vadd.f32 0.0, %v481
        %v483 = vpop.f32.mrf.mxu0
        %v484 = vadd.f32 0.0, %v483
        %485 = vmatprep.mubr.bf16.mxu0 0
        %486 = vmatmul.mubr.bf16.gmra.mxu0 %v332
        %v487 = vpop.f32.mrf.mxu0
        %v488 = vadd.f32 0.0, %v487
        %v489 = vpop.f32.mrf.mxu0
        %v490 = vadd.f32 0.0, %v489
        %v491 = vpop.f32.mrf.mxu0
        %v492 = vadd.f32 0.0, %v491
        %v493 = vpop.f32.mrf.mxu0
        %v494 = vadd.f32 0.0, %v493
        %495 = vmatprep.mubr.bf16.mxu0 0
        %496 = vmatmul.mubr.bf16.gmra.mxu0 %v333
        %v497 = vpop.f32.mrf.mxu0
        %v498 = vadd.f32 0.0, %v497
        %v499 = vpop.f32.mrf.mxu0
        %v500 = vadd.f32 0.0, %v499
        %v501 = vpop.f32.mrf.mxu0
        %v502 = vadd.f32 0.0, %v501
        %v503 = vpop.f32.mrf.mxu0
        %v504 = vadd.f32 0.0, %v503
        %505 = vmatprep.mubr.bf16.mxu0 0
        %506 = vmatmul.mubr.bf16.gmra.mxu0 %v334
        %v507 = vpop.f32.mrf.mxu0
        %v508 = vadd.f32 0.0, %v507
        %v509 = vpop.f32.mrf.mxu0
        %v510 = vadd.f32 0.0, %v509
        %v511 = vpop.f32.mrf.mxu0
        %v512 = vadd.f32 0.0, %v511
        %v513 = vpop.f32.mrf.mxu0
        %v514 = vadd.f32 0.0, %v513
        %515 = vmatprep.mubr.bf16.mxu0 0
        %516 = vmatmul.mubr.bf16.gmra.mxu0 %v335
        %v517 = vpop.f32.mrf.mxu0
        %v518 = vadd.f32 0.0, %v517
        %v519 = vpop.f32.mrf.mxu0
        %v520 = vadd.f32 0.0, %v519
        %v521 = vpop.f32.mrf.mxu0
        %v522 = vadd.f32 0.0, %v521
        %v523 = vpop.f32.mrf.mxu0
        %v524 = vadd.f32 0.0, %v523
        %525 = vmatprep.mubr.bf16.mxu0 0
        %526 = vmatmul.mubr.bf16.gmra.mxu0 %v336
        %v527 = vpop.f32.mrf.mxu0
        %v528 = vadd.f32 0.0, %v527
        %v529 = vpop.f32.mrf.mxu0
        %v530 = vadd.f32 0.0, %v529
        %v531 = vpop.f32.mrf.mxu0
        %v532 = vadd.f32 0.0, %v531
        %v533 = vpop.f32.mrf.mxu0
        %v534 = vadd.f32 0.0, %v533
        %535 = vmatprep.mubr.bf16.mxu0 0
        %536 = vmatmul.mubr.bf16.gmra.mxu0 %v337
        %v537 = vpop.f32.mrf.mxu0
        %v538 = vadd.f32 0.0, %v537
        %v539 = vpop.f32.mrf.mxu0
        %v540 = vadd.f32 0.0, %v539
        %v541 = vpop.f32.mrf.mxu0
        %v542 = vadd.f32 0.0, %v541
        %v543 = vpop.f32.mrf.mxu0
        %v544 = vadd.f32 0.0, %v543
        %545 = vmatprep.mubr.bf16.mxu0 0
        %546 = vmatmul.mubr.bf16.gmra.mxu0 %v338
        %v547 = vpop.f32.mrf.mxu0
        %v548 = vadd.f32 0.0, %v547
        %v549 = vpop.f32.mrf.mxu0
        %v550 = vadd.f32 0.0, %v549
        %v551 = vpop.f32.mrf.mxu0
        %v552 = vadd.f32 0.0, %v551
        %v553 = vpop.f32.mrf.mxu0
        %v554 = vadd.f32 0.0, %v553
        %555 = vmatprep.mubr.bf16.mxu0 0
        %556 = vmatmul.mubr.bf16.gmra.mxu0 %v339
        %v557 = vpop.f32.mrf.mxu0
        %v558 = vadd.f32 0.0, %v557
        %v559 = vpop.f32.mrf.mxu0
        %v560 = vadd.f32 0.0, %v559
        %v561 = vpop.f32.mrf.mxu0
        %v562 = vadd.f32 0.0, %v561
        %v563 = vpop.f32.mrf.mxu0
        %v564 = vadd.f32 0.0, %v563
        %565 = vmatprep.mubr.bf16.mxu0 0
        %566 = vmatmul.mubr.bf16.gmra.mxu0 %v340
        %v567 = vpop.f32.mrf.mxu0
        %v568 = vadd.f32 0.0, %v567
        %v569 = vpop.f32.mrf.mxu0
        %v570 = vadd.f32 0.0, %v569
        %v571 = vpop.f32.mrf.mxu0
        %v572 = vadd.f32 0.0, %v571
        %v573 = vpop.f32.mrf.mxu0
        %v574 = vadd.f32 0.0, %v573
        %575 = vmatprep.mubr.bf16.mxu0 0
        %576 = vmatmul.mubr.bf16.gmra.mxu0 %v341
        %v577 = vpop.f32.mrf.mxu0
        %v578 = vadd.f32 0.0, %v577
        %v579 = vpop.f32.mrf.mxu0
        %v580 = vadd.f32 0.0, %v579
        %v581 = vpop.f32.mrf.mxu0
        %v582 = vadd.f32 0.0, %v581
        %v583 = vpop.f32.mrf.mxu0
        %v584 = vadd.f32 0.0, %v583
        %585 = vmatprep.mubr.bf16.mxu0 0
        %586 = vmatmul.mubr.bf16.gmra.mxu0 %v342
        %v587 = vpop.f32.mrf.mxu0
        %v588 = vadd.f32 0.0, %v587
        %v589 = vpop.f32.mrf.mxu0
        %v590 = vadd.f32 0.0, %v589
        %v591 = vpop.f32.mrf.mxu0
        %v592 = vadd.f32 0.0, %v591
        %v593 = vpop.f32.mrf.mxu0
        %v594 = vadd.f32 0.0, %v593
        %595 = vmatprep.mubr.bf16.mxu0 0
        %596 = vmatmul.mubr.bf16.gmra.mxu0 %v343
        %v597 = vpop.f32.mrf.mxu0
        %v598 = vadd.f32 0.0, %v597
        %v599 = vpop.f32.mrf.mxu0
        %v600 = vadd.f32 0.0, %v599
        %v601 = vpop.f32.mrf.mxu0
        %v602 = vadd.f32 0.0, %v601
        %v603 = vpop.f32.mrf.mxu0
        %v604 = vadd.f32 0.0, %v603
        %605 = vmatprep.mubr.bf16.mxu0 0
        %606 = vmatmul.mubr.bf16.gmra.mxu0 %v344
        %v607 = vpop.f32.mrf.mxu0
        %v608 = vadd.f32 0.0, %v607
        %v609 = vpop.f32.mrf.mxu0
        %v610 = vadd.f32 0.0, %v609
        %v611 = vpop.f32.mrf.mxu0
        %v612 = vadd.f32 0.0, %v611
        %v613 = vpop.f32.mrf.mxu0
        %v614 = vadd.f32 0.0, %v613
        %615 = vmatprep.mubr.bf16.mxu0 0
        %616 = vmatmul.mubr.bf16.gmra.mxu0 %v345
        %v617 = vpop.f32.mrf.mxu0
        %v618 = vadd.f32 0.0, %v617
        %v619 = vpop.f32.mrf.mxu0
        %v620 = vadd.f32 0.0, %v619
        %v621 = vpop.f32.mrf.mxu0
        %v622 = vadd.f32 0.0, %v621
        %v623 = vpop.f32.mrf.mxu0
        %v624 = vadd.f32 0.0, %v623
        %625 = vmatprep.mubr.bf16.mxu0 0
        %626 = vmatmul.mubr.bf16.gmra.mxu0 %v346
        %v627 = vpop.f32.mrf.mxu0
        %v628 = vadd.f32 0.0, %v627
        %v629 = vpop.f32.mrf.mxu0
        %v630 = vadd.f32 0.0, %v629
        %v631 = vpop.f32.mrf.mxu0
        %v632 = vadd.f32 0.0, %v631
        %v633 = vpop.f32.mrf.mxu0
        %v634 = vadd.f32 0.0, %v633
        %635 = vdwg.mxu0
        %v636 = vld [vmem:[#allocation8] sm:$0x1]
        %v638 = vlaneseq
        %v639 = vshrl.u32 %v638, 7
        %v640 = vsub.s32 0, %v639
        %v641 = vrot.slane %v636, %v640
        %v643 = vadd.f32 %v480, %v641
        %v644 = vadd.f32 %v484, %v641
        %v645 = vadd.f32 %v490, %v641
        %v646 = vadd.f32 %v494, %v641
        %v647 = vadd.f32 %v500, %v641
        %v648 = vadd.f32 %v504, %v641
        %v649 = vadd.f32 %v510, %v641
        %v650 = vadd.f32 %v514, %v641
        %v651 = vadd.f32 %v520, %v641
        %v652 = vadd.f32 %v524, %v641
        %v653 = vadd.f32 %v530, %v641
        %v654 = vadd.f32 %v534, %v641
        %v655 = vadd.f32 %v540, %v641
        %v656 = vadd.f32 %v544, %v641
        %v657 = vadd.f32 %v550, %v641
        %v658 = vadd.f32 %v554, %v641
        %v659 = vadd.f32 %v560, %v641
        %v660 = vadd.f32 %v564, %v641
        %v661 = vadd.f32 %v570, %v641
        %v662 = vadd.f32 %v574, %v641
        %v663 = vadd.f32 %v580, %v641
        %v664 = vadd.f32 %v584, %v641
        %v665 = vadd.f32 %v590, %v641
        %v666 = vadd.f32 %v594, %v641
        %v667 = vadd.f32 %v600, %v641
        %v668 = vadd.f32 %v604, %v641
        %v669 = vadd.f32 %v610, %v641
        %v670 = vadd.f32 %v614, %v641
        %v671 = vadd.f32 %v620, %v641
        %v672 = vadd.f32 %v624, %v641
        %v673 = vadd.f32 %v630, %v641
        %v674 = vadd.f32 %v634, %v641
        %v675 = vpack.c.bf16 %v482, %v478
        %v676 = vpack.c.bf16 %v492, %v488
        %v677 = vpack.c.bf16 %v502, %v498
        %v678 = vpack.c.bf16 %v512, %v508
        %v679 = vpack.c.bf16 %v522, %v518
        %v680 = vpack.c.bf16 %v532, %v528
        %v681 = vpack.c.bf16 %v542, %v538
        %v682 = vpack.c.bf16 %v552, %v548
        %v683 = vpack.c.bf16 %v562, %v558
        %v684 = vpack.c.bf16 %v572, %v568
        %v685 = vpack.c.bf16 %v582, %v578
        %v686 = vpack.c.bf16 %v592, %v588
        %v687 = vpack.c.bf16 %v602, %v598
        %v688 = vpack.c.bf16 %v612, %v608
        %v689 = vpack.c.bf16 %v622, %v618
        %v690 = vpack.c.bf16 %v632, %v628
        %v691 = vld [vmem:[#allocation7] sm:$0xf]
        %v692 = vld [vmem:[#allocation7 + $0x4] sm:$0xf]
        %v693 = vld [vmem:[#allocation7 + $0x8] sm:$0xf]
        %v694 = vld [vmem:[#allocation7 + $0xc] sm:$0xf]
        %v695 = vld [vmem:[#allocation7 + $0x10] sm:$0xf]
        %v696 = vld [vmem:[#allocation7 + $0x14] sm:$0xf]
        %v697 = vld [vmem:[#allocation7 + $0x18] sm:$0xf]
        %v698 = vld [vmem:[#allocation7 + $0x1c] sm:$0xf]
        %v699 = vld [vmem:[#allocation7 + $0x20] sm:$0xf]
        %v700 = vld [vmem:[#allocation7 + $0x24] sm:$0xf]
        %v701 = vld [vmem:[#allocation7 + $0x28] sm:$0xf]
        %v702 = vld [vmem:[#allocation7 + $0x2c] sm:$0xf]
        %v703 = vld [vmem:[#allocation7 + $0x30] sm:$0xf]
        %v704 = vld [vmem:[#allocation7 + $0x34] sm:$0xf]
        %v705 = vld [vmem:[#allocation7 + $0x38] sm:$0xf]
        %v706 = vld [vmem:[#allocation7 + $0x3c] sm:$0xf]
        %v723 = vunpack.c.l.b16 %v691
        %v724 = vunpack.c.l.b16 %v692
        %v725 = vunpack.c.l.b16 %v693
        %v726 = vunpack.c.l.b16 %v694
        %v727 = vunpack.c.l.b16 %v695
        %v728 = vunpack.c.l.b16 %v696
        %v729 = vunpack.c.l.b16 %v697
        %v730 = vunpack.c.l.b16 %v698
        %v731 = vunpack.c.l.b16 %v699
        %v732 = vunpack.c.l.b16 %v700
        %v733 = vunpack.c.l.b16 %v701
        %v734 = vunpack.c.l.b16 %v702
        %v735 = vunpack.c.l.b16 %v703
        %v736 = vunpack.c.l.b16 %v704
        %v737 = vunpack.c.l.b16 %v705
        %v738 = vunpack.c.l.b16 %v706
        %v739 = vpack.c.b16 %v724, %v723
        %v740 = vpack.c.b16 %v726, %v725
        %v741 = vpack.c.b16 %v728, %v727
        %v742 = vpack.c.b16 %v730, %v729
        %v743 = vpack.c.b16 %v732, %v731
        %v744 = vpack.c.b16 %v734, %v733
        %v745 = vpack.c.b16 %v736, %v735
        %v746 = vpack.c.b16 %v738, %v737
        %755 = vmatprep.subr.bf16.mxu0 0
        %756 = vmatpush1.bf16.msra.mxu0 %v746
        %757 = vmatprep.subr.bf16.mxu0 0
        %758 = vmatpush1.bf16.msra.mxu0 %v745
        %759 = vmatprep.subr.bf16.mxu0 0
        %760 = vmatpush1.bf16.msra.mxu0 %v744
        %761 = vmatprep.subr.bf16.mxu0 0
        %762 = vmatpush1.bf16.msra.mxu0 %v743
        %763 = vmatprep.subr.bf16.mxu0 0
        %764 = vmatpush1.bf16.msra.mxu0 %v742
        %765 = vmatprep.subr.bf16.mxu0 0
        %766 = vmatpush1.bf16.msra.mxu0 %v741
        %767 = vmatprep.subr.bf16.mxu0 0
        %768 = vmatpush1.bf16.msra.mxu0 %v740
        %769 = vmatprep.subr.bf16.mxu0 0
        %770 = vmatpush1.bf16.msra.mxu0 %v739
        %771 = vmatprep.subr.bf16.mxu0 0
        %772 = vmatpush2.bf16.msra.mxu0 0
        %773 = vmatprep.subr.bf16.mxu0 0
        %774 = vmatpush2.bf16.msra.mxu0 0
        %775 = vmatprep.subr.bf16.mxu0 0
        %776 = vmatpush2.bf16.msra.mxu0 0
        %777 = vmatprep.subr.bf16.mxu0 0
        %778 = vmatpush2.bf16.msra.mxu0 0
        %779 = vmatprep.subr.bf16.mxu0 0
        %780 = vmatpush2.bf16.msra.mxu0 0
        %781 = vmatprep.subr.bf16.mxu0 0
        %782 = vmatpush2.bf16.msra.mxu0 0
        %783 = vmatprep.subr.bf16.mxu0 0
        %784 = vmatpush2.bf16.msra.mxu0 0
        %785 = vmatprep.subr.bf16.mxu0 0
        %786 = vmatpush2.bf16.msra.mxu0 0
        %787 = vmatprep.mubr.bf16.mxu0 0
        %788 = vmatmul.mubr.bf16.gmra.mxu0 %v675
        %v789 = vpop.f32.mrf.mxu0
        %v790 = vadd.f32 0.0, %v789
        %v791 = vpop.f32.mrf.mxu0
        %v792 = vpop.f32.mrf.mxu0
        %v793 = vadd.f32 0.0, %v792
        %v794 = vpop.f32.mrf.mxu0
        %795 = vmatprep.mubr.bf16.mxu0 0
        %796 = vmatmul.mubr.bf16.gmra.mxu0 %v676
        %v797 = vpop.f32.mrf.mxu0
        %v798 = vadd.f32 0.0, %v797
        %v799 = vpop.f32.mrf.mxu0
        %v800 = vpop.f32.mrf.mxu0
        %v801 = vadd.f32 0.0, %v800
        %v802 = vpop.f32.mrf.mxu0
        %803 = vmatprep.mubr.bf16.mxu0 0
        %804 = vmatmul.mubr.bf16.gmra.mxu0 %v677
        %v805 = vpop.f32.mrf.mxu0
        %v806 = vadd.f32 0.0, %v805
        %v807 = vpop.f32.mrf.mxu0
        %v808 = vpop.f32.mrf.mxu0
        %v809 = vadd.f32 0.0, %v808
        %v810 = vpop.f32.mrf.mxu0
        %811 = vmatprep.mubr.bf16.mxu0 0
        %812 = vmatmul.mubr.bf16.gmra.mxu0 %v678
        %v813 = vpop.f32.mrf.mxu0
        %v814 = vadd.f32 0.0, %v813
        %v815 = vpop.f32.mrf.mxu0
        %v816 = vpop.f32.mrf.mxu0
        %v817 = vadd.f32 0.0, %v816
        %v818 = vpop.f32.mrf.mxu0
        %819 = vmatprep.mubr.bf16.mxu0 0
        %820 = vmatmul.mubr.bf16.gmra.mxu0 %v679
        %v821 = vpop.f32.mrf.mxu0
        %v822 = vadd.f32 0.0, %v821
        %v823 = vpop.f32.mrf.mxu0
        %v824 = vpop.f32.mrf.mxu0
        %v825 = vadd.f32 0.0, %v824
        %v826 = vpop.f32.mrf.mxu0
        %827 = vmatprep.mubr.bf16.mxu0 0
        %828 = vmatmul.mubr.bf16.gmra.mxu0 %v680
        %v829 = vpop.f32.mrf.mxu0
        %v830 = vadd.f32 0.0, %v829
        %v831 = vpop.f32.mrf.mxu0
        %v832 = vpop.f32.mrf.mxu0
        %v833 = vadd.f32 0.0, %v832
        %v834 = vpop.f32.mrf.mxu0
        %835 = vmatprep.mubr.bf16.mxu0 0
        %836 = vmatmul.mubr.bf16.gmra.mxu0 %v681
        %v837 = vpop.f32.mrf.mxu0
        %v838 = vadd.f32 0.0, %v837
        %v839 = vpop.f32.mrf.mxu0
        %v840 = vpop.f32.mrf.mxu0
        %v841 = vadd.f32 0.0, %v840
        %v842 = vpop.f32.mrf.mxu0
        %843 = vmatprep.mubr.bf16.mxu0 0
        %844 = vmatmul.mubr.bf16.gmra.mxu0 %v682
        %v845 = vpop.f32.mrf.mxu0
        %v846 = vadd.f32 0.0, %v845
        %v847 = vpop.f32.mrf.mxu0
        %v848 = vpop.f32.mrf.mxu0
        %v849 = vadd.f32 0.0, %v848
        %v850 = vpop.f32.mrf.mxu0
        %851 = vmatprep.mubr.bf16.mxu0 0
        %852 = vmatmul.mubr.bf16.gmra.mxu0 %v683
        %v853 = vpop.f32.mrf.mxu0
        %v854 = vadd.f32 0.0, %v853
        %v855 = vpop.f32.mrf.mxu0
        %v856 = vpop.f32.mrf.mxu0
        %v857 = vadd.f32 0.0, %v856
        %v858 = vpop.f32.mrf.mxu0
        %859 = vmatprep.mubr.bf16.mxu0 0
        %860 = vmatmul.mubr.bf16.gmra.mxu0 %v684
        %v861 = vpop.f32.mrf.mxu0
        %v862 = vadd.f32 0.0, %v861
        %v863 = vpop.f32.mrf.mxu0
        %v864 = vpop.f32.mrf.mxu0
        %v865 = vadd.f32 0.0, %v864
        %v866 = vpop.f32.mrf.mxu0
        %867 = vmatprep.mubr.bf16.mxu0 0
        %868 = vmatmul.mubr.bf16.gmra.mxu0 %v685
        %v869 = vpop.f32.mrf.mxu0
        %v870 = vadd.f32 0.0, %v869
        %v871 = vpop.f32.mrf.mxu0
        %v872 = vpop.f32.mrf.mxu0
        %v873 = vadd.f32 0.0, %v872
        %v874 = vpop.f32.mrf.mxu0
        %875 = vmatprep.mubr.bf16.mxu0 0
        %876 = vmatmul.mubr.bf16.gmra.mxu0 %v686
        %v877 = vpop.f32.mrf.mxu0
        %v878 = vadd.f32 0.0, %v877
        %v879 = vpop.f32.mrf.mxu0
        %v880 = vpop.f32.mrf.mxu0
        %v881 = vadd.f32 0.0, %v880
        %v882 = vpop.f32.mrf.mxu0
        %883 = vmatprep.mubr.bf16.mxu0 0
        %884 = vmatmul.mubr.bf16.gmra.mxu0 %v687
        %v885 = vpop.f32.mrf.mxu0
        %v886 = vadd.f32 0.0, %v885
        %v887 = vpop.f32.mrf.mxu0
        %v888 = vpop.f32.mrf.mxu0
        %v889 = vadd.f32 0.0, %v888
        %v890 = vpop.f32.mrf.mxu0
        %891 = vmatprep.mubr.bf16.mxu0 0
        %892 = vmatmul.mubr.bf16.gmra.mxu0 %v688
        %v893 = vpop.f32.mrf.mxu0
        %v894 = vadd.f32 0.0, %v893
        %v895 = vpop.f32.mrf.mxu0
        %v896 = vpop.f32.mrf.mxu0
        %v897 = vadd.f32 0.0, %v896
        %v898 = vpop.f32.mrf.mxu0
        %899 = vmatprep.mubr.bf16.mxu0 0
        %900 = vmatmul.mubr.bf16.gmra.mxu0 %v689
        %v901 = vpop.f32.mrf.mxu0
        %v902 = vadd.f32 0.0, %v901
        %v903 = vpop.f32.mrf.mxu0
        %v904 = vpop.f32.mrf.mxu0
        %v905 = vadd.f32 0.0, %v904
        %v906 = vpop.f32.mrf.mxu0
        %907 = vmatprep.mubr.bf16.mxu0 0
        %908 = vmatmul.mubr.bf16.gmra.mxu0 %v690
        %v909 = vpop.f32.mrf.mxu0
        %v910 = vadd.f32 0.0, %v909
        %v911 = vpop.f32.mrf.mxu0
        %v912 = vpop.f32.mrf.mxu0
        %v913 = vadd.f32 0.0, %v912
        %v914 = vpop.f32.mrf.mxu0
        %915 = vdwg.mxu0
        %v916 = vmul.f32 %v790, 0.5
        %v917 = vmul.f32 %v793, 0.5
        %v918 = vmul.f32 %v798, 0.5
        %v919 = vmul.f32 %v801, 0.5
        %v920 = vmul.f32 %v806, 0.5
        %v921 = vmul.f32 %v809, 0.5
        %v922 = vmul.f32 %v814, 0.5
        %v923 = vmul.f32 %v817, 0.5
        %v924 = vmul.f32 %v822, 0.5
        %v925 = vmul.f32 %v825, 0.5
        %v926 = vmul.f32 %v830, 0.5
        %v927 = vmul.f32 %v833, 0.5
        %v928 = vmul.f32 %v838, 0.5
        %v929 = vmul.f32 %v841, 0.5
        %v930 = vmul.f32 %v846, 0.5
        %v931 = vmul.f32 %v849, 0.5
        %v932 = vmul.f32 %v854, 0.5
        %v933 = vmul.f32 %v857, 0.5
        %v934 = vmul.f32 %v862, 0.5
        %v935 = vmul.f32 %v865, 0.5
        %v936 = vmul.f32 %v870, 0.5
        %v937 = vmul.f32 %v873, 0.5
        %v938 = vmul.f32 %v878, 0.5
        %v939 = vmul.f32 %v881, 0.5
        %v940 = vmul.f32 %v886, 0.5
        %v941 = vmul.f32 %v889, 0.5
        %v942 = vmul.f32 %v894, 0.5
        %v943 = vmul.f32 %v897, 0.5
        %v944 = vmul.f32 %v902, 0.5
        %v945 = vmul.f32 %v905, 0.5
        %v946 = vmul.f32 %v910, 0.5
        %v947 = vmul.f32 %v913, 0.5
        %v948 = vmul.f32 %v790, 0.70710677
        %v949 = vmul.f32 %v793, 0.70710677
        %v950 = vmul.f32 %v798, 0.70710677
        %v951 = vmul.f32 %v801, 0.70710677
        %v952 = vmul.f32 %v806, 0.70710677
        %v953 = vmul.f32 %v809, 0.70710677
        %v954 = vmul.f32 %v814, 0.70710677
        %v955 = vmul.f32 %v817, 0.70710677
        %v956 = vmul.f32 %v822, 0.70710677
        %v957 = vmul.f32 %v825, 0.70710677
        %v958 = vmul.f32 %v830, 0.70710677
        %v959 = vmul.f32 %v833, 0.70710677
        %v960 = vmul.f32 %v838, 0.70710677
        %v961 = vmul.f32 %v841, 0.70710677
        %v962 = vmul.f32 %v846, 0.70710677
        %v963 = vmul.f32 %v849, 0.70710677
        %v964 = vmul.f32 %v854, 0.70710677
        %v965 = vmul.f32 %v857, 0.70710677
        %v966 = vmul.f32 %v862, 0.70710677
        %v967 = vmul.f32 %v865, 0.70710677
        %v968 = vmul.f32 %v870, 0.70710677
        %v969 = vmul.f32 %v873, 0.70710677
        %v970 = vmul.f32 %v878, 0.70710677
        %v971 = vmul.f32 %v881, 0.70710677
        %v972 = vmul.f32 %v886, 0.70710677
        %v973 = vmul.f32 %v889, 0.70710677
        %v974 = vmul.f32 %v894, 0.70710677
        %v975 = vmul.f32 %v897, 0.70710677
        %v976 = vmul.f32 %v902, 0.70710677
        %v977 = vmul.f32 %v905, 0.70710677
        %v978 = vmul.f32 %v910, 0.70710677
        %v979 = vmul.f32 %v913, 0.70710677
        %v980 = verf.f32.pop %v948
        %v981 = verf.f32.pop %v949
        %v982 = verf.f32.pop %v950
        %v983 = verf.f32.pop %v951
        %v984 = verf.f32.pop %v952
        %v985 = verf.f32.pop %v953
        %v986 = verf.f32.pop %v954
        %v987 = verf.f32.pop %v955
        %v988 = verf.f32.pop %v956
        %v989 = verf.f32.pop %v957
        %v990 = verf.f32.pop %v958
        %v991 = verf.f32.pop %v959
        %v992 = verf.f32.pop %v960
        %v993 = verf.f32.pop %v961
        %v994 = verf.f32.pop %v962
        %v995 = verf.f32.pop %v963
        %v996 = verf.f32.pop %v964
        %v997 = verf.f32.pop %v965
        %v998 = verf.f32.pop %v966
        %v999 = verf.f32.pop %v967
        %v1000 = verf.f32.pop %v968
        %v1001 = verf.f32.pop %v969
        %v1002 = verf.f32.pop %v970
        %v1003 = verf.f32.pop %v971
        %v1004 = verf.f32.pop %v972
        %v1005 = verf.f32.pop %v973
        %v1006 = verf.f32.pop %v974
        %v1007 = verf.f32.pop %v975
        %v1008 = verf.f32.pop %v976
        %v1009 = verf.f32.pop %v977
        %v1010 = verf.f32.pop %v978
        %v1011 = verf.f32.pop %v979
        %v1012 = vadd.f32 %v980, 1.0
        %v1013 = vadd.f32 %v981, 1.0
        %v1014 = vadd.f32 %v982, 1.0
        %v1015 = vadd.f32 %v983, 1.0
        %v1016 = vadd.f32 %v984, 1.0
        %v1017 = vadd.f32 %v985, 1.0
        %v1018 = vadd.f32 %v986, 1.0
        %v1019 = vadd.f32 %v987, 1.0
        %v1020 = vadd.f32 %v988, 1.0
        %v1021 = vadd.f32 %v989, 1.0
        %v1022 = vadd.f32 %v990, 1.0
        %v1023 = vadd.f32 %v991, 1.0
        %v1024 = vadd.f32 %v992, 1.0
        %v1025 = vadd.f32 %v993, 1.0
        %v1026 = vadd.f32 %v994, 1.0
        %v1027 = vadd.f32 %v995, 1.0
        %v1028 = vadd.f32 %v996, 1.0
        %v1029 = vadd.f32 %v997, 1.0
        %v1030 = vadd.f32 %v998, 1.0
        %v1031 = vadd.f32 %v999, 1.0
        %v1032 = vadd.f32 %v1000, 1.0
        %v1033 = vadd.f32 %v1001, 1.0
        %v1034 = vadd.f32 %v1002, 1.0
        %v1035 = vadd.f32 %v1003, 1.0
        %v1036 = vadd.f32 %v1004, 1.0
        %v1037 = vadd.f32 %v1005, 1.0
        %v1038 = vadd.f32 %v1006, 1.0
        %v1039 = vadd.f32 %v1007, 1.0
        %v1040 = vadd.f32 %v1008, 1.0
        %v1041 = vadd.f32 %v1009, 1.0
        %v1042 = vadd.f32 %v1010, 1.0
        %v1043 = vadd.f32 %v1011, 1.0
        %v1044 = vmul.f32 %v916, %v1012
        %v1045 = vmul.f32 %v917, %v1013
        %v1046 = vmul.f32 %v918, %v1014
        %v1047 = vmul.f32 %v919, %v1015
        %v1048 = vmul.f32 %v920, %v1016
        %v1049 = vmul.f32 %v921, %v1017
        %v1050 = vmul.f32 %v922, %v1018
        %v1051 = vmul.f32 %v923, %v1019
        %v1052 = vmul.f32 %v924, %v1020
        %v1053 = vmul.f32 %v925, %v1021
        %v1054 = vmul.f32 %v926, %v1022
        %v1055 = vmul.f32 %v927, %v1023
        %v1056 = vmul.f32 %v928, %v1024
        %v1057 = vmul.f32 %v929, %v1025
        %v1058 = vmul.f32 %v930, %v1026
        %v1059 = vmul.f32 %v931, %v1027
        %v1060 = vmul.f32 %v932, %v1028
        %v1061 = vmul.f32 %v933, %v1029
        %v1062 = vmul.f32 %v934, %v1030
        %v1063 = vmul.f32 %v935, %v1031
        %v1064 = vmul.f32 %v936, %v1032
        %v1065 = vmul.f32 %v937, %v1033
        %v1066 = vmul.f32 %v938, %v1034
        %v1067 = vmul.f32 %v939, %v1035
        %v1068 = vmul.f32 %v940, %v1036
        %v1069 = vmul.f32 %v941, %v1037
        %v1070 = vmul.f32 %v942, %v1038
        %v1071 = vmul.f32 %v943, %v1039
        %v1072 = vmul.f32 %v944, %v1040
        %v1073 = vmul.f32 %v945, %v1041
        %v1074 = vmul.f32 %v946, %v1042
        %v1075 = vmul.f32 %v947, %v1043
        %v1076 = vpack.c.bf16 %v1045, %v1044
        %v1077 = vpack.c.bf16 %v1047, %v1046
        %v1078 = vpack.c.bf16 %v1049, %v1048
        %v1079 = vpack.c.bf16 %v1051, %v1050
        %v1080 = vpack.c.bf16 %v1053, %v1052
        %v1081 = vpack.c.bf16 %v1055, %v1054
        %v1082 = vpack.c.bf16 %v1057, %v1056
        %v1083 = vpack.c.bf16 %v1059, %v1058
        %v1084 = vpack.c.bf16 %v1061, %v1060
        %v1085 = vpack.c.bf16 %v1063, %v1062
        %v1086 = vpack.c.bf16 %v1065, %v1064
        %v1087 = vpack.c.bf16 %v1067, %v1066
        %v1088 = vpack.c.bf16 %v1069, %v1068
        %v1089 = vpack.c.bf16 %v1071, %v1070
        %v1090 = vpack.c.bf16 %v1073, %v1072
        %v1091 = vpack.c.bf16 %v1075, %v1074
        %s1092 = scalar_lea.vmem [#allocation7], 64
        %v1093 = vld [vmem:[%s1092] sm:$0xf]
        %v1094 = vld [vmem:[%s1092 + $0x4] sm:$0xf]
        %v1095 = vld [vmem:[%s1092 + $0x8] sm:$0xf]
        %v1096 = vld [vmem:[%s1092 + $0xc] sm:$0xf]
        %v1097 = vld [vmem:[%s1092 + $0x10] sm:$0xf]
        %v1098 = vld [vmem:[%s1092 + $0x14] sm:$0xf]
        %v1099 = vld [vmem:[%s1092 + $0x18] sm:$0xf]
        %v1100 = vld [vmem:[%s1092 + $0x1c] sm:$0xf]
        %v1101 = vld [vmem:[%s1092 + $0x20] sm:$0xf]
        %v1102 = vld [vmem:[%s1092 + $0x24] sm:$0xf]
        %v1103 = vld [vmem:[%s1092 + $0x28] sm:$0xf]
        %v1104 = vld [vmem:[%s1092 + $0x2c] sm:$0xf]
        %v1105 = vld [vmem:[%s1092 + $0x30] sm:$0xf]
        %v1106 = vld [vmem:[%s1092 + $0x34] sm:$0xf]
        %v1107 = vld [vmem:[%s1092 + $0x38] sm:$0xf]
        %v1108 = vld [vmem:[%s1092 + $0x3c] sm:$0xf]
        %v1125 = vunpack.c.l.b16 %v1093
        %v1126 = vunpack.c.l.b16 %v1094
        %v1127 = vunpack.c.l.b16 %v1095
        %v1128 = vunpack.c.l.b16 %v1096
        %v1129 = vunpack.c.l.b16 %v1097
        %v1130 = vunpack.c.l.b16 %v1098
        %v1131 = vunpack.c.l.b16 %v1099
        %v1132 = vunpack.c.l.b16 %v1100
        %v1133 = vunpack.c.l.b16 %v1101
        %v1134 = vunpack.c.l.b16 %v1102
        %v1135 = vunpack.c.l.b16 %v1103
        %v1136 = vunpack.c.l.b16 %v1104
        %v1137 = vunpack.c.l.b16 %v1105
        %v1138 = vunpack.c.l.b16 %v1106
        %v1139 = vunpack.c.l.b16 %v1107
        %v1140 = vunpack.c.l.b16 %v1108
        %v1141 = vpack.c.b16 %v1126, %v1125
        %v1142 = vpack.c.b16 %v1128, %v1127
        %v1143 = vpack.c.b16 %v1130, %v1129
        %v1144 = vpack.c.b16 %v1132, %v1131
        %v1145 = vpack.c.b16 %v1134, %v1133
        %v1146 = vpack.c.b16 %v1136, %v1135
        %v1147 = vpack.c.b16 %v1138, %v1137
        %v1148 = vpack.c.b16 %v1140, %v1139
        %1157 = vmatprep.subr.bf16.mxu0 0
        %1158 = vmatpush1.bf16.msra.mxu0 %v1148
        %1159 = vmatprep.subr.bf16.mxu0 0
        %1160 = vmatpush1.bf16.msra.mxu0 %v1147
        %1161 = vmatprep.subr.bf16.mxu0 0
        %1162 = vmatpush1.bf16.msra.mxu0 %v1146
        %1163 = vmatprep.subr.bf16.mxu0 0
        %1164 = vmatpush1.bf16.msra.mxu0 %v1145
        %1165 = vmatprep.subr.bf16.mxu0 0
        %1166 = vmatpush1.bf16.msra.mxu0 %v1144
        %1167 = vmatprep.subr.bf16.mxu0 0
        %1168 = vmatpush1.bf16.msra.mxu0 %v1143
        %1169 = vmatprep.subr.bf16.mxu0 0
        %1170 = vmatpush1.bf16.msra.mxu0 %v1142
        %1171 = vmatprep.subr.bf16.mxu0 0
        %1172 = vmatpush1.bf16.msra.mxu0 %v1141
        %1173 = vmatprep.subr.bf16.mxu0 0
        %1174 = vmatpush2.bf16.msra.mxu0 0
        %1175 = vmatprep.subr.bf16.mxu0 0
        %1176 = vmatpush2.bf16.msra.mxu0 0
        %1177 = vmatprep.subr.bf16.mxu0 0
        %1178 = vmatpush2.bf16.msra.mxu0 0
        %1179 = vmatprep.subr.bf16.mxu0 0
        %1180 = vmatpush2.bf16.msra.mxu0 0
        %1181 = vmatprep.subr.bf16.mxu0 0
        %1182 = vmatpush2.bf16.msra.mxu0 0
        %1183 = vmatprep.subr.bf16.mxu0 0
        %1184 = vmatpush2.bf16.msra.mxu0 0
        %1185 = vmatprep.subr.bf16.mxu0 0
        %1186 = vmatpush2.bf16.msra.mxu0 0
        %1187 = vmatprep.subr.bf16.mxu0 0
        %1188 = vmatpush2.bf16.msra.mxu0 0
        %1189 = vmatprep.mubr.bf16.mxu0 0
        %1190 = vmatmul.mubr.bf16.gmra.mxu0 %v1076
        %v1191 = vpop.f32.mrf.mxu0
        %v1192 = vadd.f32 0.0, %v1191
        %v1193 = vpop.f32.mrf.mxu0
        %v1194 = vpop.f32.mrf.mxu0
        %v1195 = vadd.f32 0.0, %v1194
        %v1196 = vpop.f32.mrf.mxu0
        %1197 = vmatprep.mubr.bf16.mxu0 0
        %1198 = vmatmul.mubr.bf16.gmra.mxu0 %v1077
        %v1199 = vpop.f32.mrf.mxu0
        %v1200 = vadd.f32 0.0, %v1199
        %v1201 = vpop.f32.mrf.mxu0
        %v1202 = vpop.f32.mrf.mxu0
        %v1203 = vadd.f32 0.0, %v1202
        %v1204 = vpop.f32.mrf.mxu0
        %1205 = vmatprep.mubr.bf16.mxu0 0
        %1206 = vmatmul.mubr.bf16.gmra.mxu0 %v1078
        %v1207 = vpop.f32.mrf.mxu0
        %v1208 = vadd.f32 0.0, %v1207
        %v1209 = vpop.f32.mrf.mxu0
        %v1210 = vpop.f32.mrf.mxu0
        %v1211 = vadd.f32 0.0, %v1210
        %v1212 = vpop.f32.mrf.mxu0
        %1213 = vmatprep.mubr.bf16.mxu0 0
        %1214 = vmatmul.mubr.bf16.gmra.mxu0 %v1079
        %v1215 = vpop.f32.mrf.mxu0
        %v1216 = vadd.f32 0.0, %v1215
        %v1217 = vpop.f32.mrf.mxu0
        %v1218 = vpop.f32.mrf.mxu0
        %v1219 = vadd.f32 0.0, %v1218
        %v1220 = vpop.f32.mrf.mxu0
        %1221 = vmatprep.mubr.bf16.mxu0 0
        %1222 = vmatmul.mubr.bf16.gmra.mxu0 %v1080
        %v1223 = vpop.f32.mrf.mxu0
        %v1224 = vadd.f32 0.0, %v1223
        %v1225 = vpop.f32.mrf.mxu0
        %v1226 = vpop.f32.mrf.mxu0
        %v1227 = vadd.f32 0.0, %v1226
        %v1228 = vpop.f32.mrf.mxu0
        %1229 = vmatprep.mubr.bf16.mxu0 0
        %1230 = vmatmul.mubr.bf16.gmra.mxu0 %v1081
        %v1231 = vpop.f32.mrf.mxu0
        %v1232 = vadd.f32 0.0, %v1231
        %v1233 = vpop.f32.mrf.mxu0
        %v1234 = vpop.f32.mrf.mxu0
        %v1235 = vadd.f32 0.0, %v1234
        %v1236 = vpop.f32.mrf.mxu0
        %1237 = vmatprep.mubr.bf16.mxu0 0
        %1238 = vmatmul.mubr.bf16.gmra.mxu0 %v1082
        %v1239 = vpop.f32.mrf.mxu0
        %v1240 = vadd.f32 0.0, %v1239
        %v1241 = vpop.f32.mrf.mxu0
        %v1242 = vpop.f32.mrf.mxu0
        %v1243 = vadd.f32 0.0, %v1242
        %v1244 = vpop.f32.mrf.mxu0
        %1245 = vmatprep.mubr.bf16.mxu0 0
        %1246 = vmatmul.mubr.bf16.gmra.mxu0 %v1083
        %v1247 = vpop.f32.mrf.mxu0
        %v1248 = vadd.f32 0.0, %v1247
        %v1249 = vpop.f32.mrf.mxu0
        %v1250 = vpop.f32.mrf.mxu0
        %v1251 = vadd.f32 0.0, %v1250
        %v1252 = vpop.f32.mrf.mxu0
        %1253 = vmatprep.mubr.bf16.mxu0 0
        %1254 = vmatmul.mubr.bf16.gmra.mxu0 %v1084
        %v1255 = vpop.f32.mrf.mxu0
        %v1256 = vadd.f32 0.0, %v1255
        %v1257 = vpop.f32.mrf.mxu0
        %v1258 = vpop.f32.mrf.mxu0
        %v1259 = vadd.f32 0.0, %v1258
        %v1260 = vpop.f32.mrf.mxu0
        %1261 = vmatprep.mubr.bf16.mxu0 0
        %1262 = vmatmul.mubr.bf16.gmra.mxu0 %v1085
        %v1263 = vpop.f32.mrf.mxu0
        %v1264 = vadd.f32 0.0, %v1263
        %v1265 = vpop.f32.mrf.mxu0
        %v1266 = vpop.f32.mrf.mxu0
        %v1267 = vadd.f32 0.0, %v1266
        %v1268 = vpop.f32.mrf.mxu0
        %1269 = vmatprep.mubr.bf16.mxu0 0
        %1270 = vmatmul.mubr.bf16.gmra.mxu0 %v1086
        %v1271 = vpop.f32.mrf.mxu0
        %v1272 = vadd.f32 0.0, %v1271
        %v1273 = vpop.f32.mrf.mxu0
        %v1274 = vpop.f32.mrf.mxu0
        %v1275 = vadd.f32 0.0, %v1274
        %v1276 = vpop.f32.mrf.mxu0
        %1277 = vmatprep.mubr.bf16.mxu0 0
        %1278 = vmatmul.mubr.bf16.gmra.mxu0 %v1087
        %v1279 = vpop.f32.mrf.mxu0
        %v1280 = vadd.f32 0.0, %v1279
        %v1281 = vpop.f32.mrf.mxu0
        %v1282 = vpop.f32.mrf.mxu0
        %v1283 = vadd.f32 0.0, %v1282
        %v1284 = vpop.f32.mrf.mxu0
        %1285 = vmatprep.mubr.bf16.mxu0 0
        %1286 = vmatmul.mubr.bf16.gmra.mxu0 %v1088
        %v1287 = vpop.f32.mrf.mxu0
        %v1288 = vadd.f32 0.0, %v1287
        %v1289 = vpop.f32.mrf.mxu0
        %v1290 = vpop.f32.mrf.mxu0
        %v1291 = vadd.f32 0.0, %v1290
        %v1292 = vpop.f32.mrf.mxu0
        %1293 = vmatprep.mubr.bf16.mxu0 0
        %1294 = vmatmul.mubr.bf16.gmra.mxu0 %v1089
        %v1295 = vpop.f32.mrf.mxu0
        %v1296 = vadd.f32 0.0, %v1295
        %v1297 = vpop.f32.mrf.mxu0
        %v1298 = vpop.f32.mrf.mxu0
        %v1299 = vadd.f32 0.0, %v1298
        %v1300 = vpop.f32.mrf.mxu0
        %1301 = vmatprep.mubr.bf16.mxu0 0
        %1302 = vmatmul.mubr.bf16.gmra.mxu0 %v1090
        %v1303 = vpop.f32.mrf.mxu0
        %v1304 = vadd.f32 0.0, %v1303
        %v1305 = vpop.f32.mrf.mxu0
        %v1306 = vpop.f32.mrf.mxu0
        %v1307 = vadd.f32 0.0, %v1306
        %v1308 = vpop.f32.mrf.mxu0
        %1309 = vmatprep.mubr.bf16.mxu0 0
        %1310 = vmatmul.mubr.bf16.gmra.mxu0 %v1091
        %v1311 = vpop.f32.mrf.mxu0
        %v1312 = vadd.f32 0.0, %v1311
        %v1313 = vpop.f32.mrf.mxu0
        %v1314 = vpop.f32.mrf.mxu0
        %v1315 = vadd.f32 0.0, %v1314
        %v1316 = vpop.f32.mrf.mxu0
        %1317 = vdwg.mxu0
        %1318 = vst [vmem:[%s285] sm:$0xff] %v643
        %1319 = vst [vmem:[%s285 + $0x8] sm:$0xff] %v644
        %1320 = vst [vmem:[%s285 + $0x10] sm:$0xff] %v645
        %1321 = vst [vmem:[%s285 + $0x18] sm:$0xff] %v646
        %1322 = vst [vmem:[%s285 + $0x20] sm:$0xff] %v647
        %1323 = vst [vmem:[%s285 + $0x28] sm:$0xff] %v648
        %1324 = vst [vmem:[%s285 + $0x30] sm:$0xff] %v649
        %1325 = vst [vmem:[%s285 + $0x38] sm:$0xff] %v650
        %1326 = vst [vmem:[%s285 + $0x40] sm:$0xff] %v651
        %1327 = vst [vmem:[%s285 + $0x48] sm:$0xff] %v652
        %1328 = vst [vmem:[%s285 + $0x50] sm:$0xff] %v653
        %1329 = vst [vmem:[%s285 + $0x58] sm:$0xff] %v654
        %1330 = vst [vmem:[%s285 + $0x60] sm:$0xff] %v655
        %1331 = vst [vmem:[%s285 + $0x68] sm:$0xff] %v656
        %1332 = vst [vmem:[%s285 + $0x70] sm:$0xff] %v657
        %1333 = vst [vmem:[%s285 + $0x78] sm:$0xff] %v658
        %1334 = vst [vmem:[%s285 + $0x80] sm:$0xff] %v659
        %1335 = vst [vmem:[%s285 + $0x88] sm:$0xff] %v660
        %1336 = vst [vmem:[%s285 + $0x90] sm:$0xff] %v661
        %1337 = vst [vmem:[%s285 + $0x98] sm:$0xff] %v662
        %1338 = vst [vmem:[%s285 + $0xa0] sm:$0xff] %v663
        %1339 = vst [vmem:[%s285 + $0xa8] sm:$0xff] %v664
        %1340 = vst [vmem:[%s285 + $0xb0] sm:$0xff] %v665
        %1341 = vst [vmem:[%s285 + $0xb8] sm:$0xff] %v666
        %1342 = vst [vmem:[%s285 + $0xc0] sm:$0xff] %v667
        %1343 = vst [vmem:[%s285 + $0xc8] sm:$0xff] %v668
        %1344 = vst [vmem:[%s285 + $0xd0] sm:$0xff] %v669
        %1345 = vst [vmem:[%s285 + $0xd8] sm:$0xff] %v670
        %1346 = vst [vmem:[%s285 + $0xe0] sm:$0xff] %v671
        %1347 = vst [vmem:[%s285 + $0xe8] sm:$0xff] %v672
        %1348 = vst [vmem:[%s285 + $0xf0] sm:$0xff] %v673
        %1349 = vst [vmem:[%s285 + $0xf8] sm:$0xff] %v674
        %v1350 = vsub.f32 %v1192, %v643
        %v1351 = vsub.f32 %v1195, %v644
        %v1352 = vsub.f32 %v1200, %v645
        %v1353 = vsub.f32 %v1203, %v646
        %v1354 = vsub.f32 %v1208, %v647
        %v1355 = vsub.f32 %v1211, %v648
        %v1356 = vsub.f32 %v1216, %v649
        %v1357 = vsub.f32 %v1219, %v650
        %v1358 = vsub.f32 %v1224, %v651
        %v1359 = vsub.f32 %v1227, %v652
        %v1360 = vsub.f32 %v1232, %v653
        %v1361 = vsub.f32 %v1235, %v654
        %v1362 = vsub.f32 %v1240, %v655
        %v1363 = vsub.f32 %v1243, %v656
        %v1364 = vsub.f32 %v1248, %v657
        %v1365 = vsub.f32 %v1251, %v658
        %v1366 = vsub.f32 %v1256, %v659
        %v1367 = vsub.f32 %v1259, %v660
        %v1368 = vsub.f32 %v1264, %v661
        %v1369 = vsub.f32 %v1267, %v662
        %v1370 = vsub.f32 %v1272, %v663
        %v1371 = vsub.f32 %v1275, %v664
        %v1372 = vsub.f32 %v1280, %v665
        %v1373 = vsub.f32 %v1283, %v666
        %v1374 = vsub.f32 %v1288, %v667
        %v1375 = vsub.f32 %v1291, %v668
        %v1376 = vsub.f32 %v1296, %v669
        %v1377 = vsub.f32 %v1299, %v670
        %v1378 = vsub.f32 %v1304, %v671
        %v1379 = vsub.f32 %v1307, %v672
        %v1380 = vsub.f32 %v1312, %v673
        %v1381 = vsub.f32 %v1315, %v674
        %v1382 = vmul.f32 %v1350, %v1350
        %v1383 = vmul.f32 %v1351, %v1351
        %v1384 = vmul.f32 %v1352, %v1352
        %v1385 = vmul.f32 %v1353, %v1353
        %v1386 = vmul.f32 %v1354, %v1354
        %v1387 = vmul.f32 %v1355, %v1355
        %v1388 = vmul.f32 %v1356, %v1356
        %v1389 = vmul.f32 %v1357, %v1357
        %v1390 = vmul.f32 %v1358, %v1358
        %v1391 = vmul.f32 %v1359, %v1359
        %v1392 = vmul.f32 %v1360, %v1360
        %v1393 = vmul.f32 %v1361, %v1361
        %v1394 = vmul.f32 %v1362, %v1362
        %v1395 = vmul.f32 %v1363, %v1363
        %v1396 = vmul.f32 %v1364, %v1364
        %v1397 = vmul.f32 %v1365, %v1365
        %v1398 = vmul.f32 %v1366, %v1366
        %v1399 = vmul.f32 %v1367, %v1367
        %v1400 = vmul.f32 %v1368, %v1368
        %v1401 = vmul.f32 %v1369, %v1369
        %v1402 = vmul.f32 %v1370, %v1370
        %v1403 = vmul.f32 %v1371, %v1371
        %v1404 = vmul.f32 %v1372, %v1372
        %v1405 = vmul.f32 %v1373, %v1373
        %v1406 = vmul.f32 %v1374, %v1374
        %v1407 = vmul.f32 %v1375, %v1375
        %v1408 = vmul.f32 %v1376, %v1376
        %v1409 = vmul.f32 %v1377, %v1377
        %v1410 = vmul.f32 %v1378, %v1378
        %v1411 = vmul.f32 %v1379, %v1379
        %v1412 = vmul.f32 %v1380, %v1380
        %v1413 = vmul.f32 %v1381, %v1381
        %v1414 = vadd.f32 %v1382, %v1383
        %v1415 = vadd.f32 %v1414, %v1384
        %v1416 = vadd.f32 %v1415, %v1385
        %v1417 = vadd.f32 %v1416, %v1386
        %v1418 = vadd.f32 %v1417, %v1387
        %v1419 = vadd.f32 %v1418, %v1388
        %v1420 = vadd.f32 %v1419, %v1389
        %v1421 = vadd.f32 %v1420, %v1390
        %v1422 = vadd.f32 %v1421, %v1391
        %v1423 = vadd.f32 %v1422, %v1392
        %v1424 = vadd.f32 %v1423, %v1393
        %v1425 = vadd.f32 %v1424, %v1394
        %v1426 = vadd.f32 %v1425, %v1395
        %v1427 = vadd.f32 %v1426, %v1396
        %v1428 = vadd.f32 %v1427, %v1397
        %v1429 = vadd.f32 %v1428, %v1398
        %v1430 = vadd.f32 %v1429, %v1399
        %v1431 = vadd.f32 %v1430, %v1400
        %v1432 = vadd.f32 %v1431, %v1401
        %v1433 = vadd.f32 %v1432, %v1402
        %v1434 = vadd.f32 %v1433, %v1403
        %v1435 = vadd.f32 %v1434, %v1404
        %v1436 = vadd.f32 %v1435, %v1405
        %v1437 = vadd.f32 %v1436, %v1406
        %v1438 = vadd.f32 %v1437, %v1407
        %v1439 = vadd.f32 %v1438, %v1408
        %v1440 = vadd.f32 %v1439, %v1409
        %v1441 = vadd.f32 %v1440, %v1410
        %v1442 = vadd.f32 %v1441, %v1411
        %v1443 = vadd.f32 %v1442, %v1412
        %v1444 = vadd.f32 %v1443, %v1413
        %1445 = vadd.xlane.f32.xlu0 %v1444
        %v1446 = vpop.xlane.xlu0 %1445
        %v1447 = vrot.slane %v1446, 4
        %v1448 = vadd.f32 %v1446, %v1447
        %v1449 = vrot.slane %v1448, 2
        %v1450 = vadd.f32 %v1448, %v1449
        %v1451 = vrot.slane %v1450, 1
        %v1452 = vadd.f32 %v1450, %v1451
        %s1453 = vtos %v1452
        %v1454 = vstv %s1453
        %1455 = vst [vmem:[%s297] sm:$0xff] %v1454
        %s1456 = sand.u32 %s122, 1
        %s1457 = scalar_lea.sflag [#allocation4], %s1456
        %s1458 = sand.u32 %s122, 1
        %s1459 = smul.addr %s1458, 256
        %s1460 = scalar_lea.vmem [#allocation10], %s1459
        %p1461 = scmp.lt.s32.totalorder %s25, 1
        %s1462 = scalar_select %p1461, %s25, 1
        %s1463 = smul.addr %s1462, 8
        %s1464 = scalar_lea.vmem %s5, %s1463
        // Predicated region
        $region53: #{test_model_forward.1} parent=35 // pred_check
          %p1465 = pneg %p132
        $region54: #{test_model_forward.1} parent=35 // pred_check_branch
          %1467 = sbr.rel (%p1465) target = $region56
        $region55: #{test_model_forward.1} parent=35 // pred_region
          %s1468 = smul.u32 32, %s25
          %s1470 = ssub.s32 4096, 4096
          %1471 = vsyncadd %s1457, %s1470
          %s1472 = smul.addr %s1468, 128
          %s1473 = scalar_lea.hbm %s4, %s1472
          %s1474 = sshll.u32 %s1460, 4
          %s1475 = int_to_ptr.vmem [resolvable:$true] %s1474
          %1480 = dma.vmem_to_hbm [thread:$0]  %s1475, 4096, %s1473, %s1457, 128, 128, 8
        $region56: #{test_model_forward.1} parent=35 // pred_fallthru
          _
        // Predicated region
        $region57: #{test_model_forward.1} parent=35 // pred_check
          %p1481 = pneg %p158
        $region58: #{test_model_forward.1} parent=35 // pred_check_branch
          %1483 = sbr.rel (%p1481) target = $region60
        $region59: #{test_model_forward.1} parent=35 // pred_region
          _
        $region60: #{test_model_forward.1} parent=35 // pred_fallthru
          _
      $region36: #{test_model_forward.1} parent=5 // pred_fallthru
        _
      %p1484 = scmp.le.s32.totalorder 2, %s20
      // Predicated region
      $region61: #{test_model_forward.1} parent=5 // pred_check
        %p1485 = pneg %p1484
      $region62: #{test_model_forward.1} parent=5 // pred_check_branch
        %1487 = sbr.rel (%p1485) target = $region64
      $region63: #{test_model_forward.1} parent=5 // pred_region
        %s1488 = ssub.s32 %s20, 2
        // Predicated region
        $region65: #{test_model_forward.1} parent=63 // pred_check
          %p1489 = pneg %p138
        $region66: #{test_model_forward.1} parent=63 // pred_check_branch
          %1491 = sbr.rel (%p1489) target = $region68
        $region67: #{test_model_forward.1} parent=63 // pred_region
          %s1492 = sand.u32 %s123, 1
          %s1493 = scalar_lea.sflag [#allocation4], %s1492
          %s1494 = sand.u32 %s123, 1
          %s1495 = smul.addr %s1494, 256
          %s1496 = scalar_lea.vmem [#allocation10], %s1495
          %1497 = dma.done %s1493, 4096
        $region68: #{test_model_forward.1} parent=63 // pred_fallthru
          _
        // Predicated region
        $region69: #{test_model_forward.1} parent=63 // pred_check
          %p1498 = pneg %p164
        $region70: #{test_model_forward.1} parent=63 // pred_check_branch
          %1500 = sbr.rel (%p1498) target = $region72
        $region71: #{test_model_forward.1} parent=63 // pred_region
          %p1501 = scmp.lt.s32.totalorder %s26, 1
          %s1502 = scalar_select %p1501, %s26, 1
          %s1503 = smul.addr %s1502, 8
          %s1504 = scalar_lea.vmem %s5, %s1503
        $region72: #{test_model_forward.1} parent=63 // pred_fallthru
          _
      $region64: #{test_model_forward.1} parent=5 // pred_fallthru
        _
    $region6: #{test_model_forward.1} parent=1 // loop_footer
      %s24 = sadd.s32 1, %s20
    $region7: #{test_model_forward.1} parent=1 // loop_footer_branch
      %19 = sbr.rel target = $region3
    $region8: #{test_model_forward.1} parent=1 // loop_exit
      _
    %1505 = vsyncpa [#allocation3], 1
    %s1506 = scalar_lea.sflag [#allocation3], 1
    %1507 = vsyncpa %s1506, 1
    %1508 = vsyncpa [#allocation6], 1
    %1509 = vsyncpa [#allocation9], 1
    %1510 = vsyncpa [#allocation4], 1
    %s1511 = scalar_lea.sflag [#allocation4], 1
    %1512 = vsyncpa %s1511, 1

</llo_original>
